<compile_context>
chip_gen: v7x
topology: tpu7x:2x2x1
jax: 0.10.0
libtpu: 0.0.40
codegen_flags: <defaults>
</compile_context>

<pallas_src>
import math
import functools

import jax
import jax.numpy as jnp
from jax.experimental import pallas as pl
from jax.experimental.pallas import tpu as pltpu

INPUT_DIM = 384
LATENT_DIM = 64
H1 = 256   # encoder hidden 1 / decoder hidden 2
H2 = 128   # encoder hidden 2 / decoder hidden 1
Z_PAD = 128   # latent padded to a full 128-lane width for unmasked stores
LANE = 128    # row-tile granularity (MXU/vreg friendly)


def _round_up(n, m):
    return (n + m - 1) // m * m


def _gelu(x, approximate):
    if approximate:
        # tanh approximation: the tanh routes to the EUP slot (otherwise idle),
        # leaving the VALU slot free now that the matmuls are bf16 on the MXU.
        c = math.sqrt(2.0 / math.pi)
        return 0.5 * x * (1.0 + jnp.tanh(c * (x + 0.044715 * x * x * x)))
    # PyTorch nn.GELU() default: exact erf formulation.
    return 0.5 * x * (1.0 + jax.lax.erf(x * (1.0 / math.sqrt(2.0))))


def _ae_kernel(x_ref,
               w1_ref, b1_ref, w2_ref, b2_ref, w3_ref, b3_ref,
               w4_ref, b4_ref, w5_ref, b5_ref, w6_ref, b6_ref,
               recon_ref, z_ref, *, op_dtype, approx_gelu):
    def lin(a, w_ref, b_ref):
        # MXU-native operands (bf16 by default), f32 accumulation; bias added in f32.
        return jnp.dot(a.astype(op_dtype), w_ref[...],
                       preferred_element_type=jnp.float32) + b_ref[...]

    x = x_ref[...]

    # ---------------- encoder ----------------
    h = jnp.maximum(lin(x, w1_ref, b1_ref), 0.0)       # ReLU (dropout = identity, eval)
    h = _gelu(lin(h, w2_ref, b2_ref), approx_gelu)      # GELU (dropout = identity, eval)

    # w3/b3 are zero-padded to 128 output lanes -> z columns [64:128] are exactly 0,
    # and the store below is lane-dense (no masked vst).
    z = lin(h, w3_ref, b3_ref)
    z_ref[...] = z.astype(z_ref.dtype)

    # ---------------- decoder ----------------
    # w4 has zero-padded input rows [64:128], so the padded z columns are inert.
    d = jnp.maximum(lin(z, w4_ref, b4_ref), 0.0)        # ReLU
    d = _gelu(lin(d, w5_ref, b5_ref), approx_gelu)      # GELU
    recon_ref[...] = lin(d, w6_ref, b6_ref).astype(recon_ref.dtype)


@functools.partial(
    jax.jit,
    static_argnames=("block_b", "bf16_matmul", "approx_gelu", "vmem_limit_bytes"))
def sentence_autoencoder_forward(x, params, block_b=512, bf16_matmul=True,
                                 approx_gelu=True, vmem_limit_bytes=None):
    """x: (B, INPUT_DIM) float32. Returns (reconstructed (B, 384), z (B, 64))."""
    B, D = x.shape
    assert D == INPUT_DIM

    # Row tiling: pad the batch only to a 128-row stripe (dead work < 128 rows),
    # then choose the largest 128-multiple tile that (a) divides the padded
    # batch, (b) fits block_b, and (c) leaves at least 2 grid steps whenever the
    # padded batch has >=2 stripes, so the "parallel" grid axis actually shards
    # across both v7x TensorCores (harmless extra step on single-TC v5e/v6e).
    n_stripes = _round_up(B, LANE) // LANE
    max_d = max(1, block_b // LANE)
    d_best = 1
    for d in range(1, n_stripes + 1):
        if n_stripes % d == 0 and d <= max_d and (d < n_stripes or n_stripes == 1):
            d_best = d
    eff_block = d_best * LANE
    Bp = n_stripes * LANE
    if Bp != B:
        x = jnp.pad(x, ((0, Bp - B), (0, 0)))

    (w1, b1, w2, b2, w3, b3, w4, b4, w5, b5, w6, b6) = params

    # Lane-pad the latent projection: zero output columns on w3/b3 and zero
    # input rows on w4 keep the math identical while making z 128 lanes wide.
    w3 = jnp.pad(w3, ((0, 0), (0, Z_PAD - LATENT_DIM)))
    b3 = jnp.pad(b3, ((0, Z_PAD - LATENT_DIM),))
    w4 = jnp.pad(w4, ((0, Z_PAD - LATENT_DIM), (0, 0)))

    # bf16 weights (MXU-native); biases stay f32 and are added post-accumulation.
    op_dtype = jnp.bfloat16 if bf16_matmul else jnp.float32
    weights = [w.astype(op_dtype) for w in (w1, w2, w3, w4, w5, w6)]
    biases = [b.reshape(1, -1).astype(jnp.float32)
              for b in (b1, b2, b3, b4, b5, b6)]
    flat_params = [p for wb in zip(weights, biases) for p in wb]

    def const_spec(arr):
        # Whole-array block, same block index every grid step: the ~0.6 MiB of
        # bf16 weights stays resident in VMEM and is DMA'd only once.
        # TODO(synk): pipeline_mode=pl.Buffered(1) would also drop the unused
        # second pipeline buffer for these constants (~0.6 MiB extra headroom).
        return pl.BlockSpec(arr.shape, lambda i: (0,) * arr.ndim)

    grid = (Bp // eff_block,)

    in_specs = [pl.BlockSpec((eff_block, INPUT_DIM), lambda i: (i, 0))]
    in_specs += [const_spec(p) for p in flat_params]

    out_specs = [
        pl.BlockSpec((eff_block, INPUT_DIM), lambda i: (i, 0)),   # reconstructed
        pl.BlockSpec((eff_block, Z_PAD), lambda i: (i, 0)),       # z (lane-padded)
    ]
    out_shape = (
        jax.ShapeDtypeStruct((Bp, INPUT_DIM), jnp.float32),
        jax.ShapeDtypeStruct((Bp, Z_PAD), jnp.float32),
    )

    kernel = functools.partial(_ae_kernel, op_dtype=op_dtype,
                               approx_gelu=approx_gelu)

    recon, z_pad = pl.pallas_call(
        kernel,
        grid=grid,
        in_specs=in_specs,
        out_specs=out_specs,
        out_shape=out_shape,
        compiler_params=pltpu.CompilerParams(
            dimension_semantics=("parallel",),      # row tiles shard across TCs (v7x)
            vmem_limit_bytes=vmem_limit_bytes),     # bump when raising block_b (v6e)
    )(x, *flat_params)

    # Strip batch padding and the latent lane padding.
    return recon[:B], z_pad[:B, :LATENT_DIM]


def init_params(key):
    """Deterministic kaiming-uniform-like init (matches nn.Linear shapes)."""
    dims = [(INPUT_DIM, H1), (H1, H2), (H2, LATENT_DIM),      # encoder
            (LATENT_DIM, H2), (H2, H1), (H1, INPUT_DIM)]      # decoder
    params = []
    for (fan_in, fan_out) in dims:
        key, kw, kb = jax.random.split(key, 3)
        bound = 1.0 / math.sqrt(fan_in)
        w = jax.random.uniform(kw, (fan_in, fan_out), jnp.float32, -bound, bound)
        b = jax.random.uniform(kb, (fan_out,), jnp.float32, -bound, bound)
        params += [w, b]
    return tuple(params)


def _reference_forward(x, params, bf16_matmul=True, approx_gelu=True):
    """Pure-JAX reference with matching precision settings."""
    (w1, b1, w2, b2, w3, b3, w4, b4, w5, b5, w6, b6) = params
    op_dtype = jnp.bfloat16 if bf16_matmul else jnp.float32
    prec = None if bf16_matmul else jax.lax.Precision.HIGHEST

    def lin(a, w, b):
        return jnp.dot(a.astype(op_dtype), w.astype(op_dtype),
                       preferred_element_type=jnp.float32, precision=prec) + b

    h = jnp.maximum(lin(x, w1, b1), 0.0)
    h = _gelu(lin(h, w2, b2), approx_gelu)
    z = lin(h, w3, b3)
    d = jnp.maximum(lin(z, w4, b4), 0.0)
    d = _gelu(lin(d, w5, b5), approx_gelu)
    recon = lin(d, w6, b6)
    return recon, z


if __name__ == "__main__":
    key = jax.random.PRNGKey(0)
    kx1, kx2, kp = jax.random.split(key, 3)
    params = init_params(kp)

    # 1) Small batch, default fast path (bf16 MXU matmuls + tanh GELU on EUP).
    B1 = 16
    x1 = jax.random.normal(kx1, (B1, INPUT_DIM), jnp.float32)
    recon1, z1 = sentence_autoencoder_forward(x1, params)
    jax.block_until_ready((recon1, z1))
    r_ref1, z_ref1 = _reference_forward(x1, params)
    assert recon1.shape == (B1, INPUT_DIM) and z1.shape == (B1, LATENT_DIM)
    assert jnp.allclose(recon1, r_ref1, atol=5e-3, rtol=5e-3)
    assert jnp.allclose(z1, z_ref1, atol=5e-3, rtol=5e-3)

    # 2) Non-multiple batch: exercises 128-stripe padding and a multi-step grid
    #    (300 -> 384 padded rows, three 128-row tiles -> both v7x TCs busy).
    B2 = 300
    x2 = jax.random.normal(kx2, (B2, INPUT_DIM), jnp.float32)
    recon2, z2 = sentence_autoencoder_forward(x2, params, block_b=512)
    jax.block_until_ready((recon2, z2))
    r_ref2, z_ref2 = _reference_forward(x2, params)
    assert recon2.shape == (B2, INPUT_DIM) and z2.shape == (B2, LATENT_DIM)
    assert jnp.allclose(recon2, r_ref2, atol=5e-3, rtol=5e-3)
    assert jnp.allclose(z2, z_ref2, atol=5e-3, rtol=5e-3)

    # 3) Exact-semantics path (f32 matmuls + erf GELU), matching PyTorch eval().
    recon3, z3 = sentence_autoencoder_forward(x1, params, bf16_matmul=False,
                                              approx_gelu=False)
    jax.block_until_ready((recon3, z3))
    r_ref3, z_ref3 = _reference_forward(x1, params, bf16_matmul=False,
                                        approx_gelu=False)
    assert jnp.allclose(recon3, r_ref3, atol=1e-3, rtol=1e-3)
    assert jnp.allclose(z3, z_ref3, atol=1e-3, rtol=1e-3)

    print("KERNEL_OK")
</pallas_src>

<mosaic_0001>
module attributes {stable_mosaic.version = 11 : i64} {
  func.func @_ae_kernel(%arg0: i32, %arg1: memref<128x384xf32, #tpu.memory_space<vmem>>, %arg2: memref<384x256xbf16, #tpu.memory_space<vmem>>, %arg3: memref<1x256xf32, #tpu.memory_space<vmem>>, %arg4: memref<256x128xbf16, #tpu.memory_space<vmem>>, %arg5: memref<1x128xf32, #tpu.memory_space<vmem>>, %arg6: memref<128x128xbf16, #tpu.memory_space<vmem>>, %arg7: memref<1x128xf32, #tpu.memory_space<vmem>>, %arg8: memref<128x128xbf16, #tpu.memory_space<vmem>>, %arg9: memref<1x128xf32, #tpu.memory_space<vmem>>, %arg10: memref<128x256xbf16, #tpu.memory_space<vmem>>, %arg11: memref<1x256xf32, #tpu.memory_space<vmem>>, %arg12: memref<256x384xbf16, #tpu.memory_space<vmem>>, %arg13: memref<1x384xf32, #tpu.memory_space<vmem>>, %arg14: memref<128x384xf32, #tpu.memory_space<vmem>>, %arg15: memref<128x128xf32, #tpu.memory_space<vmem>>) attributes {dimension_semantics = [#tpu.dimension_semantics<parallel>], iteration_bounds = array<i64: 1>, scalar_prefetch = 0 : i64, scratch_operands = 0 : i64, tpu.core_type = #tpu.core_type<tc>, window_params = [{transform_indices = @transform_0, window_bounds = array<i64: 128, 384>}, {pipeline_mode = #tpu.pipeline_mode<synchronous>, transform_indices = @transform_1, window_bounds = array<i64: 384, 256>}, {pipeline_mode = #tpu.pipeline_mode<synchronous>, transform_indices = @transform_2, window_bounds = array<i64: 1, 256>}, {pipeline_mode = #tpu.pipeline_mode<synchronous>, transform_indices = @transform_3, window_bounds = array<i64: 256, 128>}, {pipeline_mode = #tpu.pipeline_mode<synchronous>, transform_indices = @transform_4, window_bounds = array<i64: 1, 128>}, {pipeline_mode = #tpu.pipeline_mode<synchronous>, transform_indices = @transform_5, window_bounds = array<i64: 128, 128>}, {pipeline_mode = #tpu.pipeline_mode<synchronous>, transform_indices = @transform_6, window_bounds = array<i64: 1, 128>}, {pipeline_mode = #tpu.pipeline_mode<synchronous>, transform_indices = @transform_7, window_bounds = array<i64: 128, 128>}, {pipeline_mode = #tpu.pipeline_mode<synchronous>, transform_indices = @transform_8, window_bounds = array<i64: 1, 128>}, {pipeline_mode = #tpu.pipeline_mode<synchronous>, transform_indices = @transform_9, window_bounds = array<i64: 128, 256>}, {pipeline_mode = #tpu.pipeline_mode<synchronous>, transform_indices = @transform_10, window_bounds = array<i64: 1, 256>}, {pipeline_mode = #tpu.pipeline_mode<synchronous>, transform_indices = @transform_11, window_bounds = array<i64: 256, 384>}, {pipeline_mode = #tpu.pipeline_mode<synchronous>, transform_indices = @transform_12, window_bounds = array<i64: 1, 384>}, {transform_indices = @transform_13, window_bounds = array<i64: 128, 384>}, {transform_indices = @transform_14, window_bounds = array<i64: 128, 128>}]} {
    %c0 = arith.constant 0 : index
    %c0_0 = arith.constant 0 : index
    %0 = vector.load %arg1[%c0, %c0_0] : memref<128x384xf32, #tpu.memory_space<vmem>>, vector<128x384xf32>
    %1 = arith.truncf %0 : vector<128x384xf32> to vector<128x384xbf16>
    %c0_1 = arith.constant 0 : index
    %c0_2 = arith.constant 0 : index
    %2 = vector.load %arg2[%c0_1, %c0_2] : memref<384x256xbf16, #tpu.memory_space<vmem>>, vector<384x256xbf16>
    %cst = arith.constant dense<0.000000e+00> : vector<128x256xf32>
    %3 = tpu.matmul %1, %2, %cst {dimension_numbers = #tpu.dot_dimension_numbers<[1], [0], [0], [1], [0, 0, 1, 1], [], []>} : vector<128x384xbf16>, vector<384x256xbf16>, vector<128x256xf32> -> vector<128x256xf32>
    %c0_3 = arith.constant 0 : index
    %c0_4 = arith.constant 0 : index
    %4 = vector.load %arg3[%c0_3, %c0_4] : memref<1x256xf32, #tpu.memory_space<vmem>>, vector<1x256xf32>
    %5 = vector.broadcast %4 : vector<1x256xf32> to vector<128x256xf32>
    %6 = arith.addf %3, %5 : vector<128x256xf32>
    %cst_5 = arith.constant 0.000000e+00 : f32
    %7 = vector.broadcast %cst_5 : f32 to vector<128x256xf32>
    %8 = arith.maximumf %6, %7 : vector<128x256xf32>
    %9 = arith.truncf %8 : vector<128x256xf32> to vector<128x256xbf16>
    %c0_6 = arith.constant 0 : index
    %c0_7 = arith.constant 0 : index
    %10 = vector.load %arg4[%c0_6, %c0_7] : memref<256x128xbf16, #tpu.memory_space<vmem>>, vector<256x128xbf16>
    %cst_8 = arith.constant dense<0.000000e+00> : vector<128x128xf32>
    %11 = tpu.matmul %9, %10, %cst_8 {dimension_numbers = #tpu.dot_dimension_numbers<[1], [0], [0], [1], [0, 0, 1, 1], [], []>} : vector<128x256xbf16>, vector<256x128xbf16>, vector<128x128xf32> -> vector<128x128xf32>
    %c0_9 = arith.constant 0 : index
    %c0_10 = arith.constant 0 : index
    %12 = vector.load %arg5[%c0_9, %c0_10] : memref<1x128xf32, #tpu.memory_space<vmem>>, vector<1x128xf32>
    %13 = vector.broadcast %12 : vector<1x128xf32> to vector<128x128xf32>
    %14 = arith.addf %11, %13 : vector<128x128xf32>
    %cst_11 = arith.constant 5.000000e-01 : f32
    %15 = vector.broadcast %cst_11 : f32 to vector<128x128xf32>
    %16 = arith.mulf %15, %14 : vector<128x128xf32>
    %cst_12 = arith.constant 4.471500e-02 : f32
    %17 = vector.broadcast %cst_12 : f32 to vector<128x128xf32>
    %18 = arith.mulf %17, %14 : vector<128x128xf32>
    %19 = arith.mulf %18, %14 : vector<128x128xf32>
    %20 = arith.mulf %19, %14 : vector<128x128xf32>
    %21 = arith.addf %14, %20 : vector<128x128xf32>
    %cst_13 = arith.constant 0.797884583 : f32
    %22 = vector.broadcast %cst_13 : f32 to vector<128x128xf32>
    %23 = arith.mulf %22, %21 : vector<128x128xf32>
    %24 = math.tanh %23 : vector<128x128xf32>
    %cst_14 = arith.constant 1.000000e+00 : f32
    %25 = vector.broadcast %cst_14 : f32 to vector<128x128xf32>
    %26 = arith.addf %25, %24 : vector<128x128xf32>
    %27 = arith.mulf %16, %26 : vector<128x128xf32>
    %28 = arith.truncf %27 : vector<128x128xf32> to vector<128x128xbf16>
    %c0_15 = arith.constant 0 : index
    %c0_16 = arith.constant 0 : index
    %29 = vector.load %arg6[%c0_15, %c0_16] : memref<128x128xbf16, #tpu.memory_space<vmem>>, vector<128x128xbf16>
    %cst_17 = arith.constant dense<0.000000e+00> : vector<128x128xf32>
    %30 = tpu.matmul %28, %29, %cst_17 {dimension_numbers = #tpu.dot_dimension_numbers<[1], [0], [0], [1], [0, 0, 1, 1], [], []>} : vector<128x128xbf16>, vector<128x128xbf16>, vector<128x128xf32> -> vector<128x128xf32>
    %c0_18 = arith.constant 0 : index
    %c0_19 = arith.constant 0 : index
    %31 = vector.load %arg7[%c0_18, %c0_19] : memref<1x128xf32, #tpu.memory_space<vmem>>, vector<1x128xf32>
    %32 = vector.broadcast %31 : vector<1x128xf32> to vector<128x128xf32>
    %33 = arith.addf %30, %32 : vector<128x128xf32>
    %c0_20 = arith.constant 0 : index
    %c0_21 = arith.constant 0 : index
    %34 = vector.load %arg15[%c0_20, %c0_21] : memref<128x128xf32, #tpu.memory_space<vmem>>, vector<128x128xf32>
    tpu.vector_store %arg15[%c0_20, %c0_21], %33 {strides = array<i32>} : memref<128x128xf32, #tpu.memory_space<vmem>>, vector<128x128xf32>,
    %35 = arith.truncf %33 : vector<128x128xf32> to vector<128x128xbf16>
    %c0_22 = arith.constant 0 : index
    %c0_23 = arith.constant 0 : index
    %36 = vector.load %arg8[%c0_22, %c0_23] : memref<128x128xbf16, #tpu.memory_space<vmem>>, vector<128x128xbf16>
    %cst_24 = arith.constant dense<0.000000e+00> : vector<128x128xf32>
    %37 = tpu.matmul %35, %36, %cst_24 {dimension_numbers = #tpu.dot_dimension_numbers<[1], [0], [0], [1], [0, 0, 1, 1], [], []>} : vector<128x128xbf16>, vector<128x128xbf16>, vector<128x128xf32> -> vector<128x128xf32>
    %c0_25 = arith.constant 0 : index
    %c0_26 = arith.constant 0 : index
    %38 = vector.load %arg9[%c0_25, %c0_26] : memref<1x128xf32, #tpu.memory_space<vmem>>, vector<1x128xf32>
    %39 = vector.broadcast %38 : vector<1x128xf32> to vector<128x128xf32>
    %40 = arith.addf %37, %39 : vector<128x128xf32>
    %cst_27 = arith.constant 0.000000e+00 : f32
    %41 = vector.broadcast %cst_27 : f32 to vector<128x128xf32>
    %42 = arith.maximumf %40, %41 : vector<128x128xf32>
    %43 = arith.truncf %42 : vector<128x128xf32> to vector<128x128xbf16>
    %c0_28 = arith.constant 0 : index
    %c0_29 = arith.constant 0 : index
    %44 = vector.load %arg10[%c0_28, %c0_29] : memref<128x256xbf16, #tpu.memory_space<vmem>>, vector<128x256xbf16>
    %cst_30 = arith.constant dense<0.000000e+00> : vector<128x256xf32>
    %45 = tpu.matmul %43, %44, %cst_30 {dimension_numbers = #tpu.dot_dimension_numbers<[1], [0], [0], [1], [0, 0, 1, 1], [], []>} : vector<128x128xbf16>, vector<128x256xbf16>, vector<128x256xf32> -> vector<128x256xf32>
    %c0_31 = arith.constant 0 : index
    %c0_32 = arith.constant 0 : index
    %46 = vector.load %arg11[%c0_31, %c0_32] : memref<1x256xf32, #tpu.memory_space<vmem>>, vector<1x256xf32>
    %47 = vector.broadcast %46 : vector<1x256xf32> to vector<128x256xf32>
    %48 = arith.addf %45, %47 : vector<128x256xf32>
    %cst_33 = arith.constant 5.000000e-01 : f32
    %49 = vector.broadcast %cst_33 : f32 to vector<128x256xf32>
    %50 = arith.mulf %49, %48 : vector<128x256xf32>
    %cst_34 = arith.constant 4.471500e-02 : f32
    %51 = vector.broadcast %cst_34 : f32 to vector<128x256xf32>
    %52 = arith.mulf %51, %48 : vector<128x256xf32>
    %53 = arith.mulf %52, %48 : vector<128x256xf32>
    %54 = arith.mulf %53, %48 : vector<128x256xf32>
    %55 = arith.addf %48, %54 : vector<128x256xf32>
    %cst_35 = arith.constant 0.797884583 : f32
    %56 = vector.broadcast %cst_35 : f32 to vector<128x256xf32>
    %57 = arith.mulf %56, %55 : vector<128x256xf32>
    %58 = math.tanh %57 : vector<128x256xf32>
    %cst_36 = arith.constant 1.000000e+00 : f32
    %59 = vector.broadcast %cst_36 : f32 to vector<128x256xf32>
    %60 = arith.addf %59, %58 : vector<128x256xf32>
    %61 = arith.mulf %50, %60 : vector<128x256xf32>
    %62 = arith.truncf %61 : vector<128x256xf32> to vector<128x256xbf16>
    %c0_37 = arith.constant 0 : index
    %c0_38 = arith.constant 0 : index
    %63 = vector.load %arg12[%c0_37, %c0_38] : memref<256x384xbf16, #tpu.memory_space<vmem>>, vector<256x384xbf16>
    %cst_39 = arith.constant dense<0.000000e+00> : vector<128x384xf32>
    %64 = tpu.matmul %62, %63, %cst_39 {dimension_numbers = #tpu.dot_dimension_numbers<[1], [0], [0], [1], [0, 0, 1, 1], [], []>} : vector<128x256xbf16>, vector<256x384xbf16>, vector<128x384xf32> -> vector<128x384xf32>
    %c0_40 = arith.constant 0 : index
    %c0_41 = arith.constant 0 : index
    %65 = vector.load %arg13[%c0_40, %c0_41] : memref<1x384xf32, #tpu.memory_space<vmem>>, vector<1x384xf32>
    %66 = vector.broadcast %65 : vector<1x384xf32> to vector<128x384xf32>
    %67 = arith.addf %64, %66 : vector<128x384xf32>
    %c0_42 = arith.constant 0 : index
    %c0_43 = arith.constant 0 : index
    %68 = vector.load %arg14[%c0_42, %c0_43] : memref<128x384xf32, #tpu.memory_space<vmem>>, vector<128x384xf32>
    tpu.vector_store %arg14[%c0_42, %c0_43], %67 {strides = array<i32>} : memref<128x384xf32, #tpu.memory_space<vmem>>, vector<128x384xf32>,
    return
  }
  func.func @transform_0(%arg0: i32) -> (i32, i32) {
    %c0_i32 = arith.constant 0 : i32
    %c0_i32_0 = arith.constant 0 : i32
    return %arg0, %c0_i32 : i32, i32
  }
  func.func @transform_1(%arg0: i32) -> (i32, i32) {
    %c0_i32 = arith.constant 0 : i32
    %c0_i32_0 = arith.constant 0 : i32
    %c0_i32_1 = arith.constant 0 : i32
    return %c0_i32, %c0_i32_0 : i32, i32
  }
  func.func @transform_2(%arg0: i32) -> (i32, i32) {
    %c0_i32 = arith.constant 0 : i32
    %c0_i32_0 = arith.constant 0 : i32
    %c0_i32_1 = arith.constant 0 : i32
    return %c0_i32, %c0_i32_0 : i32, i32
  }
  func.func @transform_3(%arg0: i32) -> (i32, i32) {
    %c0_i32 = arith.constant 0 : i32
    %c0_i32_0 = arith.constant 0 : i32
    %c0_i32_1 = arith.constant 0 : i32
    return %c0_i32, %c0_i32_0 : i32, i32
  }
  func.func @transform_4(%arg0: i32) -> (i32, i32) {
    %c0_i32 = arith.constant 0 : i32
    %c0_i32_0 = arith.constant 0 : i32
    %c0_i32_1 = arith.constant 0 : i32
    return %c0_i32, %c0_i32_0 : i32, i32
  }
  func.func @transform_5(%arg0: i32) -> (i32, i32) {
    %c0_i32 = arith.constant 0 : i32
    %c0_i32_0 = arith.constant 0 : i32
    %c0_i32_1 = arith.constant 0 : i32
    return %c0_i32, %c0_i32_0 : i32, i32
  }
  func.func @transform_6(%arg0: i32) -> (i32, i32) {
    %c0_i32 = arith.constant 0 : i32
    %c0_i32_0 = arith.constant 0 : i32
    %c0_i32_1 = arith.constant 0 : i32
    return %c0_i32, %c0_i32_0 : i32, i32
  }
  func.func @transform_7(%arg0: i32) -> (i32, i32) {
    %c0_i32 = arith.constant 0 : i32
    %c0_i32_0 = arith.constant 0 : i32
    %c0_i32_1 = arith.constant 0 : i32
    return %c0_i32, %c0_i32_0 : i32, i32
  }
  func.func @transform_8(%arg0: i32) -> (i32, i32) {
    %c0_i32 = arith.constant 0 : i32
    %c0_i32_0 = arith.constant 0 : i32
    %c0_i32_1 = arith.constant 0 : i32
    return %c0_i32, %c0_i32_0 : i32, i32
  }
  func.func @transform_9(%arg0: i32) -> (i32, i32) {
    %c0_i32 = arith.constant 0 : i32
    %c0_i32_0 = arith.constant 0 : i32
    %c0_i32_1 = arith.constant 0 : i32
    return %c0_i32, %c0_i32_0 : i32, i32
  }
  func.func @transform_10(%arg0: i32) -> (i32, i32) {
    %c0_i32 = arith.constant 0 : i32
    %c0_i32_0 = arith.constant 0 : i32
    %c0_i32_1 = arith.constant 0 : i32
    return %c0_i32, %c0_i32_0 : i32, i32
  }
  func.func @transform_11(%arg0: i32) -> (i32, i32) {
    %c0_i32 = arith.constant 0 : i32
    %c0_i32_0 = arith.constant 0 : i32
    %c0_i32_1 = arith.constant 0 : i32
    return %c0_i32, %c0_i32_0 : i32, i32
  }
  func.func @transform_12(%arg0: i32) -> (i32, i32) {
    %c0_i32 = arith.constant 0 : i32
    %c0_i32_0 = arith.constant 0 : i32
    %c0_i32_1 = arith.constant 0 : i32
    return %c0_i32, %c0_i32_0 : i32, i32
  }
  func.func @transform_13(%arg0: i32) -> (i32, i32) {
    %c0_i32 = arith.constant 0 : i32
    %c0_i32_0 = arith.constant 0 : i32
    return %arg0, %c0_i32 : i32, i32
  }
  func.func @transform_14(%arg0: i32) -> (i32, i32) {
    %c0_i32 = arith.constant 0 : i32
    %c0_i32_0 = arith.constant 0 : i32
    return %arg0, %c0_i32 : i32, i32
  }
}

</mosaic_0001>

<llo_original>
// kernel: sentence_autoencoder_forward.1
$region0: #{sentence_autoencoder_forward.1}
  #allocation0 [shape = 'u32[]', space=smem, size = 0x4, offset = 0x4, fixed_abs, tag = 'smem constant byte address 0x4 - core index']
  #allocation1 [shape = 'u32[144,128]{1,0:T(1,128)}', space=vmem, size = 0x12000, scoped, tag = 'internal scratch']
  %s0 = inlined_call_operand.vmem [shape: f32[128,384], index: 0, kind: input, shape index: {}]
  %s1 = inlined_call_operand.vmem [shape: bf16[384,256], index: 1, kind: input, shape index: {}]
  %s2 = inlined_call_operand.vmem [shape: f32[1,256], index: 2, kind: input, shape index: {}]
  %s3 = inlined_call_operand.vmem [shape: bf16[256,128], index: 3, kind: input, shape index: {}]
  %s4 = inlined_call_operand.vmem [shape: f32[1,128], index: 4, kind: input, shape index: {}]
  %s5 = inlined_call_operand.vmem [shape: bf16[128,128], index: 5, kind: input, shape index: {}]
  %s6 = inlined_call_operand.vmem [shape: f32[1,128], index: 6, kind: input, shape index: {}]
  %s7 = inlined_call_operand.vmem [shape: bf16[128,128], index: 7, kind: input, shape index: {}]
  %s8 = inlined_call_operand.vmem [shape: f32[1,128], index: 8, kind: input, shape index: {}]
  %s9 = inlined_call_operand.vmem [shape: bf16[128,256], index: 9, kind: input, shape index: {}]
  %s10 = inlined_call_operand.vmem [shape: f32[1,256], index: 10, kind: input, shape index: {}]
  %s11 = inlined_call_operand.vmem [shape: bf16[256,384], index: 11, kind: input, shape index: {}]
  %s12 = inlined_call_operand.vmem [shape: f32[1,384], index: 12, kind: input, shape index: {}]
  %s13 = inlined_call_operand.vmem [shape: f32[128,384], index: 13, kind: output, shape index: {0}]
  %s14 = inlined_call_operand.vmem [shape: f32[128,128], index: 14, kind: output, shape index: {1}]
  %15 = xla_tuple %s13, %s14
  %s16 = sld [smem:[#allocation0]]
  $region70: #{sentence_autoencoder_forward.1} parent=0
    _
  %s18 = ssub.s32 1, %s16
  %s19 = scalar_select 0, %s18, %s16
  // Predicated region
  $region2: #{sentence_autoencoder_forward.1} parent=0 // pred_check
    _
  $region3: #{sentence_autoencoder_forward.1} parent=0 // pred_check_branch
    %21 = sbr.rel (0) target = $region5
  $region4: #{sentence_autoencoder_forward.1} parent=0 // pred_region
    _
  $region5: #{sentence_autoencoder_forward.1} parent=0 // pred_fallthru
    _
  // Predicated region
  $region6: #{sentence_autoencoder_forward.1} parent=0 // pred_check
    _
  $region7: #{sentence_autoencoder_forward.1} parent=0 // pred_check_branch
    %23 = sbr.rel (0) target = $region9
  $region8: #{sentence_autoencoder_forward.1} parent=0 // pred_region
    _
  $region9: #{sentence_autoencoder_forward.1} parent=0 // pred_fallthru
    _
  // Predicated region
  $region10: #{sentence_autoencoder_forward.1} parent=0 // pred_check
    _
  $region11: #{sentence_autoencoder_forward.1} parent=0 // pred_check_branch
    %25 = sbr.rel (0) target = $region13
  $region12: #{sentence_autoencoder_forward.1} parent=0 // pred_region
    _
  $region13: #{sentence_autoencoder_forward.1} parent=0 // pred_fallthru
    _
  // Predicated region
  $region14: #{sentence_autoencoder_forward.1} parent=0 // pred_check
    _
  $region15: #{sentence_autoencoder_forward.1} parent=0 // pred_check_branch
    %27 = sbr.rel (0) target = $region17
  $region16: #{sentence_autoencoder_forward.1} parent=0 // pred_region
    _
  $region17: #{sentence_autoencoder_forward.1} parent=0 // pred_fallthru
    _
  // Predicated region
  $region18: #{sentence_autoencoder_forward.1} parent=0 // pred_check
    _
  $region19: #{sentence_autoencoder_forward.1} parent=0 // pred_check_branch
    %29 = sbr.rel (0) target = $region21
  $region20: #{sentence_autoencoder_forward.1} parent=0 // pred_region
    _
  $region21: #{sentence_autoencoder_forward.1} parent=0 // pred_fallthru
    _
  // Predicated region
  $region22: #{sentence_autoencoder_forward.1} parent=0 // pred_check
    _
  $region23: #{sentence_autoencoder_forward.1} parent=0 // pred_check_branch
    %31 = sbr.rel (0) target = $region25
  $region24: #{sentence_autoencoder_forward.1} parent=0 // pred_region
    _
  $region25: #{sentence_autoencoder_forward.1} parent=0 // pred_fallthru
    _
  // Predicated region
  $region26: #{sentence_autoencoder_forward.1} parent=0 // pred_check
    _
  $region27: #{sentence_autoencoder_forward.1} parent=0 // pred_check_branch
    %33 = sbr.rel (0) target = $region29
  $region28: #{sentence_autoencoder_forward.1} parent=0 // pred_region
    _
  $region29: #{sentence_autoencoder_forward.1} parent=0 // pred_fallthru
    _
  // Predicated region
  $region30: #{sentence_autoencoder_forward.1} parent=0 // pred_check
    _
  $region31: #{sentence_autoencoder_forward.1} parent=0 // pred_check_branch
    %35 = sbr.rel (0) target = $region33
  $region32: #{sentence_autoencoder_forward.1} parent=0 // pred_region
    _
  $region33: #{sentence_autoencoder_forward.1} parent=0 // pred_fallthru
    _
  // Predicated region
  $region34: #{sentence_autoencoder_forward.1} parent=0 // pred_check
    _
  $region35: #{sentence_autoencoder_forward.1} parent=0 // pred_check_branch
    %37 = sbr.rel (0) target = $region37
  $region36: #{sentence_autoencoder_forward.1} parent=0 // pred_region
    _
  $region37: #{sentence_autoencoder_forward.1} parent=0 // pred_fallthru
    _
  // Predicated region
  $region38: #{sentence_autoencoder_forward.1} parent=0 // pred_check
    _
  $region39: #{sentence_autoencoder_forward.1} parent=0 // pred_check_branch
    %39 = sbr.rel (0) target = $region41
  $region40: #{sentence_autoencoder_forward.1} parent=0 // pred_region
    _
  $region41: #{sentence_autoencoder_forward.1} parent=0 // pred_fallthru
    _
  // Predicated region
  $region42: #{sentence_autoencoder_forward.1} parent=0 // pred_check
    _
  $region43: #{sentence_autoencoder_forward.1} parent=0 // pred_check_branch
    %41 = sbr.rel (0) target = $region45
  $region44: #{sentence_autoencoder_forward.1} parent=0 // pred_region
    _
  $region45: #{sentence_autoencoder_forward.1} parent=0 // pred_fallthru
    _
  // Predicated region
  $region46: #{sentence_autoencoder_forward.1} parent=0 // pred_check
    _
  $region47: #{sentence_autoencoder_forward.1} parent=0 // pred_check_branch
    %43 = sbr.rel (0) target = $region49
  $region48: #{sentence_autoencoder_forward.1} parent=0 // pred_region
    _
  $region49: #{sentence_autoencoder_forward.1} parent=0 // pred_fallthru
    _
  // Predicated region
  $region50: #{sentence_autoencoder_forward.1} parent=0 // pred_check
    _
  $region51: #{sentence_autoencoder_forward.1} parent=0 // pred_check_branch
    %45 = sbr.rel (0) target = $region53
  $region52: #{sentence_autoencoder_forward.1} parent=0 // pred_region
    _
  $region53: #{sentence_autoencoder_forward.1} parent=0 // pred_fallthru
    _
  %v47 = vld [vmem:[%s0] sm:$0xff]
  %v48 = vld [vmem:[%s0 + $0x8] sm:$0xff]
  %v49 = vld [vmem:[%s0 + $0x10] sm:$0xff]
  %v50 = vld [vmem:[%s0 + $0x18] sm:$0xff]
  %v51 = vld [vmem:[%s0 + $0x20] sm:$0xff]
  %v52 = vld [vmem:[%s0 + $0x28] sm:$0xff]
  %v53 = vld [vmem:[%s0 + $0x30] sm:$0xff]
  %v54 = vld [vmem:[%s0 + $0x38] sm:$0xff]
  %v55 = vld [vmem:[%s0 + $0x40] sm:$0xff]
  %v56 = vld [vmem:[%s0 + $0x48] sm:$0xff]
  %v57 = vld [vmem:[%s0 + $0x50] sm:$0xff]
  %v58 = vld [vmem:[%s0 + $0x58] sm:$0xff]
  %v59 = vld [vmem:[%s0 + $0x60] sm:$0xff]
  %v60 = vld [vmem:[%s0 + $0x68] sm:$0xff]
  %v61 = vld [vmem:[%s0 + $0x70] sm:$0xff]
  %v62 = vld [vmem:[%s0 + $0x78] sm:$0xff]
  %v63 = vld [vmem:[%s0 + $0x80] sm:$0xff]
  %v64 = vld [vmem:[%s0 + $0x88] sm:$0xff]
  %v65 = vld [vmem:[%s0 + $0x90] sm:$0xff]
  %v66 = vld [vmem:[%s0 + $0x98] sm:$0xff]
  %v67 = vld [vmem:[%s0 + $0xa0] sm:$0xff]
  %v68 = vld [vmem:[%s0 + $0xa8] sm:$0xff]
  %v69 = vld [vmem:[%s0 + $0xb0] sm:$0xff]
  %v70 = vld [vmem:[%s0 + $0xb8] sm:$0xff]
  %v71 = vld [vmem:[%s0 + $0xc0] sm:$0xff]
  %v72 = vld [vmem:[%s0 + $0xc8] sm:$0xff]
  %v73 = vld [vmem:[%s0 + $0xd0] sm:$0xff]
  %v74 = vld [vmem:[%s0 + $0xd8] sm:$0xff]
  %v75 = vld [vmem:[%s0 + $0xe0] sm:$0xff]
  %v76 = vld [vmem:[%s0 + $0xe8] sm:$0xff]
  %v77 = vld [vmem:[%s0 + $0xf0] sm:$0xff]
  %v78 = vld [vmem:[%s0 + $0xf8] sm:$0xff]
  %v79 = vld [vmem:[%s0 + $0x100] sm:$0xff]
  %v80 = vld [vmem:[%s0 + $0x108] sm:$0xff]
  %v81 = vld [vmem:[%s0 + $0x110] sm:$0xff]
  %v82 = vld [vmem:[%s0 + $0x118] sm:$0xff]
  %v83 = vld [vmem:[%s0 + $0x120] sm:$0xff]
  %v84 = vld [vmem:[%s0 + $0x128] sm:$0xff]
  %v85 = vld [vmem:[%s0 + $0x130] sm:$0xff]
  %v86 = vld [vmem:[%s0 + $0x138] sm:$0xff]
  %v87 = vld [vmem:[%s0 + $0x140] sm:$0xff]
  %v88 = vld [vmem:[%s0 + $0x148] sm:$0xff]
  %v89 = vld [vmem:[%s0 + $0x150] sm:$0xff]
  %v90 = vld [vmem:[%s0 + $0x158] sm:$0xff]
  %v91 = vld [vmem:[%s0 + $0x160] sm:$0xff]
  %v92 = vld [vmem:[%s0 + $0x168] sm:$0xff]
  %v93 = vld [vmem:[%s0 + $0x170] sm:$0xff]
  %v94 = vld [vmem:[%s0 + $0x178] sm:$0xff]
  %v95 = vpack.c.bf16 %v50, %v47
  %v96 = vpack.c.bf16 %v51, %v48
  %v97 = vpack.c.bf16 %v52, %v49
  %v98 = vpack.c.bf16 %v56, %v53
  %v99 = vpack.c.bf16 %v57, %v54
  %v100 = vpack.c.bf16 %v58, %v55
  %v101 = vpack.c.bf16 %v62, %v59
  %v102 = vpack.c.bf16 %v63, %v60
  %v103 = vpack.c.bf16 %v64, %v61
  %v104 = vpack.c.bf16 %v68, %v65
  %v105 = vpack.c.bf16 %v69, %v66
  %v106 = vpack.c.bf16 %v70, %v67
  %v107 = vpack.c.bf16 %v74, %v71
  %v108 = vpack.c.bf16 %v75, %v72
  %v109 = vpack.c.bf16 %v76, %v73
  %v110 = vpack.c.bf16 %v80, %v77
  %v111 = vpack.c.bf16 %v81, %v78
  %v112 = vpack.c.bf16 %v82, %v79
  %v113 = vpack.c.bf16 %v86, %v83
  %v114 = vpack.c.bf16 %v87, %v84
  %v115 = vpack.c.bf16 %v88, %v85
  %v116 = vpack.c.bf16 %v92, %v89
  %v117 = vpack.c.bf16 %v93, %v90
  %v118 = vpack.c.bf16 %v94, %v91
  %v119 = vld [vmem:[%s1] sm:$0xff]
  %v120 = vld [vmem:[%s1 + $0x8] sm:$0xff]
  %v121 = vld [vmem:[%s1 + $0x10] sm:$0xff]
  %v122 = vld [vmem:[%s1 + $0x18] sm:$0xff]
  %v123 = vld [vmem:[%s1 + $0x20] sm:$0xff]
  %v124 = vld [vmem:[%s1 + $0x28] sm:$0xff]
  %v125 = vld [vmem:[%s1 + $0x30] sm:$0xff]
  %v126 = vld [vmem:[%s1 + $0x38] sm:$0xff]
  %v127 = vld [vmem:[%s1 + $0x40] sm:$0xff]
  %v128 = vld [vmem:[%s1 + $0x48] sm:$0xff]
  %v129 = vld [vmem:[%s1 + $0x50] sm:$0xff]
  %v130 = vld [vmem:[%s1 + $0x58] sm:$0xff]
  %v131 = vld [vmem:[%s1 + $0x60] sm:$0xff]
  %v132 = vld [vmem:[%s1 + $0x68] sm:$0xff]
  %v133 = vld [vmem:[%s1 + $0x70] sm:$0xff]
  %v134 = vld [vmem:[%s1 + $0x78] sm:$0xff]
  %v135 = vld [vmem:[%s1 + $0x80] sm:$0xff]
  %v136 = vld [vmem:[%s1 + $0x88] sm:$0xff]
  %v137 = vld [vmem:[%s1 + $0x90] sm:$0xff]
  %v138 = vld [vmem:[%s1 + $0x98] sm:$0xff]
  %v139 = vld [vmem:[%s1 + $0xa0] sm:$0xff]
  %v140 = vld [vmem:[%s1 + $0xa8] sm:$0xff]
  %v141 = vld [vmem:[%s1 + $0xb0] sm:$0xff]
  %v142 = vld [vmem:[%s1 + $0xb8] sm:$0xff]
  %v143 = vld [vmem:[%s1 + $0xc0] sm:$0xff]
  %v144 = vld [vmem:[%s1 + $0xc8] sm:$0xff]
  %v145 = vld [vmem:[%s1 + $0xd0] sm:$0xff]
  %v146 = vld [vmem:[%s1 + $0xd8] sm:$0xff]
  %v147 = vld [vmem:[%s1 + $0xe0] sm:$0xff]
  %v148 = vld [vmem:[%s1 + $0xe8] sm:$0xff]
  %v149 = vld [vmem:[%s1 + $0xf0] sm:$0xff]
  %v150 = vld [vmem:[%s1 + $0xf8] sm:$0xff]
  %v151 = vld [vmem:[%s1 + $0x100] sm:$0xff]
  %v152 = vld [vmem:[%s1 + $0x108] sm:$0xff]
  %v153 = vld [vmem:[%s1 + $0x110] sm:$0xff]
  %v154 = vld [vmem:[%s1 + $0x118] sm:$0xff]
  %v155 = vld [vmem:[%s1 + $0x120] sm:$0xff]
  %v156 = vld [vmem:[%s1 + $0x128] sm:$0xff]
  %v157 = vld [vmem:[%s1 + $0x130] sm:$0xff]
  %v158 = vld [vmem:[%s1 + $0x138] sm:$0xff]
  %v159 = vld [vmem:[%s1 + $0x140] sm:$0xff]
  %v160 = vld [vmem:[%s1 + $0x148] sm:$0xff]
  %v161 = vld [vmem:[%s1 + $0x150] sm:$0xff]
  %v162 = vld [vmem:[%s1 + $0x158] sm:$0xff]
  %v163 = vld [vmem:[%s1 + $0x160] sm:$0xff]
  %v164 = vld [vmem:[%s1 + $0x168] sm:$0xff]
  %v165 = vld [vmem:[%s1 + $0x170] sm:$0xff]
  %v166 = vld [vmem:[%s1 + $0x178] sm:$0xff]
  %v167 = vld [vmem:[%s2] sm:$0x3]
  %v169 = vlaneseq
  %v170 = vshrl.u32 %v169, 7
  %v171 = vsub.s32 0, %v170
  %v172 = vrot.slane %v167, %v171
  %v173 = vlaneseq
  %v174 = vshrl.u32 %v173, 7
  %v175 = vsub.s32 1, %v174
  %v176 = vrot.slane %v167, %v175
  %v227 = vunpack.c.l.b16 %v119
  %v228 = vunpack.c.h.b16 %v119
  %v229 = vunpack.c.l.b16 %v120
  %v230 = vunpack.c.h.b16 %v120
  %v231 = vunpack.c.l.b16 %v121
  %v232 = vunpack.c.h.b16 %v121
  %v233 = vunpack.c.l.b16 %v122
  %v234 = vunpack.c.h.b16 %v122
  %v235 = vunpack.c.l.b16 %v123
  %v236 = vunpack.c.h.b16 %v123
  %v237 = vunpack.c.l.b16 %v124
  %v238 = vunpack.c.h.b16 %v124
  %v239 = vunpack.c.l.b16 %v125
  %v240 = vunpack.c.h.b16 %v125
  %v241 = vunpack.c.l.b16 %v126
  %v242 = vunpack.c.h.b16 %v126
  %v243 = vunpack.c.l.b16 %v127
  %v244 = vunpack.c.h.b16 %v127
  %v245 = vunpack.c.l.b16 %v128
  %v246 = vunpack.c.h.b16 %v128
  %v247 = vunpack.c.l.b16 %v129
  %v248 = vunpack.c.h.b16 %v129
  %v249 = vunpack.c.l.b16 %v130
  %v250 = vunpack.c.h.b16 %v130
  %v251 = vunpack.c.l.b16 %v131
  %v252 = vunpack.c.h.b16 %v131
  %v253 = vunpack.c.l.b16 %v132
  %v254 = vunpack.c.h.b16 %v132
  %v255 = vunpack.c.l.b16 %v133
  %v256 = vunpack.c.h.b16 %v133
  %v257 = vunpack.c.l.b16 %v134
  %v258 = vunpack.c.h.b16 %v134
  %v259 = vunpack.c.l.b16 %v135
  %v260 = vunpack.c.h.b16 %v135
  %v261 = vunpack.c.l.b16 %v136
  %v262 = vunpack.c.h.b16 %v136
  %v263 = vunpack.c.l.b16 %v137
  %v264 = vunpack.c.h.b16 %v137
  %v265 = vunpack.c.l.b16 %v138
  %v266 = vunpack.c.h.b16 %v138
  %v267 = vunpack.c.l.b16 %v139
  %v268 = vunpack.c.h.b16 %v139
  %v269 = vunpack.c.l.b16 %v140
  %v270 = vunpack.c.h.b16 %v140
  %v271 = vunpack.c.l.b16 %v141
  %v272 = vunpack.c.h.b16 %v141
  %v273 = vunpack.c.l.b16 %v142
  %v274 = vunpack.c.h.b16 %v142
  %v275 = vunpack.c.l.b16 %v143
  %v276 = vunpack.c.h.b16 %v143
  %v277 = vunpack.c.l.b16 %v144
  %v278 = vunpack.c.h.b16 %v144
  %v279 = vunpack.c.l.b16 %v145
  %v280 = vunpack.c.h.b16 %v145
  %v281 = vunpack.c.l.b16 %v146
  %v282 = vunpack.c.h.b16 %v146
  %v283 = vunpack.c.l.b16 %v147
  %v284 = vunpack.c.h.b16 %v147
  %v285 = vunpack.c.l.b16 %v148
  %v286 = vunpack.c.h.b16 %v148
  %v287 = vunpack.c.l.b16 %v149
  %v288 = vunpack.c.h.b16 %v149
  %v289 = vunpack.c.l.b16 %v150
  %v290 = vunpack.c.h.b16 %v150
  %v291 = vunpack.c.l.b16 %v151
  %v292 = vunpack.c.h.b16 %v151
  %v293 = vunpack.c.l.b16 %v152
  %v294 = vunpack.c.h.b16 %v152
  %v295 = vunpack.c.l.b16 %v153
  %v296 = vunpack.c.h.b16 %v153
  %v297 = vunpack.c.l.b16 %v154
  %v298 = vunpack.c.h.b16 %v154
  %v299 = vunpack.c.l.b16 %v155
  %v300 = vunpack.c.h.b16 %v155
  %v301 = vunpack.c.l.b16 %v156
  %v302 = vunpack.c.h.b16 %v156
  %v303 = vunpack.c.l.b16 %v157
  %v304 = vunpack.c.h.b16 %v157
  %v305 = vunpack.c.l.b16 %v158
  %v306 = vunpack.c.h.b16 %v158
  %v307 = vunpack.c.l.b16 %v159
  %v308 = vunpack.c.h.b16 %v159
  %v309 = vunpack.c.l.b16 %v160
  %v310 = vunpack.c.h.b16 %v160
  %v311 = vunpack.c.l.b16 %v161
  %v312 = vunpack.c.h.b16 %v161
  %v313 = vunpack.c.l.b16 %v162
  %v314 = vunpack.c.h.b16 %v162
  %v315 = vunpack.c.l.b16 %v163
  %v316 = vunpack.c.h.b16 %v163
  %v317 = vunpack.c.l.b16 %v164
  %v318 = vunpack.c.h.b16 %v164
  %v319 = vunpack.c.l.b16 %v165
  %v320 = vunpack.c.h.b16 %v165
  %v321 = vunpack.c.l.b16 %v166
  %v322 = vunpack.c.h.b16 %v166
  %v323 = vpack.c.b16 %v229, %v227
  %v324 = vpack.c.b16 %v230, %v228
  %v325 = vpack.c.b16 %v233, %v231
  %v326 = vpack.c.b16 %v234, %v232
  %v327 = vpack.c.b16 %v237, %v235
  %v328 = vpack.c.b16 %v238, %v236
  %v329 = vpack.c.b16 %v241, %v239
  %v330 = vpack.c.b16 %v242, %v240
  %v331 = vpack.c.b16 %v245, %v243
  %v332 = vpack.c.b16 %v246, %v244
  %v333 = vpack.c.b16 %v249, %v247
  %v334 = vpack.c.b16 %v250, %v248
  %v335 = vpack.c.b16 %v253, %v251
  %v336 = vpack.c.b16 %v254, %v252
  %v337 = vpack.c.b16 %v257, %v255
  %v338 = vpack.c.b16 %v258, %v256
  %v339 = vpack.c.b16 %v261, %v259
  %v340 = vpack.c.b16 %v262, %v260
  %v341 = vpack.c.b16 %v265, %v263
  %v342 = vpack.c.b16 %v266, %v264
  %v343 = vpack.c.b16 %v269, %v267
  %v344 = vpack.c.b16 %v270, %v268
  %v345 = vpack.c.b16 %v273, %v271
  %v346 = vpack.c.b16 %v274, %v272
  %v347 = vpack.c.b16 %v277, %v275
  %v348 = vpack.c.b16 %v278, %v276
  %v349 = vpack.c.b16 %v281, %v279
  %v350 = vpack.c.b16 %v282, %v280
  %v351 = vpack.c.b16 %v285, %v283
  %v352 = vpack.c.b16 %v286, %v284
  %v353 = vpack.c.b16 %v289, %v287
  %v354 = vpack.c.b16 %v290, %v288
  %v355 = vpack.c.b16 %v293, %v291
  %v356 = vpack.c.b16 %v294, %v292
  %v357 = vpack.c.b16 %v297, %v295
  %v358 = vpack.c.b16 %v298, %v296
  %v359 = vpack.c.b16 %v301, %v299
  %v360 = vpack.c.b16 %v302, %v300
  %v361 = vpack.c.b16 %v305, %v303
  %v362 = vpack.c.b16 %v306, %v304
  %v363 = vpack.c.b16 %v309, %v307
  %v364 = vpack.c.b16 %v310, %v308
  %v365 = vpack.c.b16 %v313, %v311
  %v366 = vpack.c.b16 %v314, %v312
  %v367 = vpack.c.b16 %v317, %v315
  %v368 = vpack.c.b16 %v318, %v316
  %v369 = vpack.c.b16 %v321, %v319
  %v370 = vpack.c.b16 %v322, %v320
  %419 = vmatprep.subr.bf16.mxu0 %v324
  %420 = vmatpush1.bf16.msra.mxu0 %v323
  %421 = vmatprep.subr.bf16.mxu0 %v326
  %422 = vmatpush1.bf16.msra.mxu0 %v325
  %423 = vmatprep.subr.bf16.mxu0 %v328
  %424 = vmatpush1.bf16.msra.mxu0 %v327
  %425 = vmatprep.subr.bf16.mxu0 %v330
  %426 = vmatpush1.bf16.msra.mxu0 %v329
  %427 = vmatprep.subr.bf16.mxu0 %v332
  %428 = vmatpush1.bf16.msra.mxu0 %v331
  %429 = vmatprep.subr.bf16.mxu0 %v334
  %430 = vmatpush1.bf16.msra.mxu0 %v333
  %431 = vmatprep.subr.bf16.mxu0 %v336
  %432 = vmatpush1.bf16.msra.mxu0 %v335
  %433 = vmatprep.subr.bf16.mxu0 %v338
  %434 = vmatpush1.bf16.msra.mxu0 %v337
  %435 = vmatprep.subr.bf16.mxu0 %v340
  %436 = vmatpush1.bf16.msra.mxu0 %v339
  %437 = vmatprep.subr.bf16.mxu0 %v342
  %438 = vmatpush1.bf16.msra.mxu0 %v341
  %439 = vmatprep.subr.bf16.mxu0 %v344
  %440 = vmatpush1.bf16.msra.mxu0 %v343
  %441 = vmatprep.subr.bf16.mxu0 %v346
  %442 = vmatpush1.bf16.msra.mxu0 %v345
  %443 = vmatprep.subr.bf16.mxu0 %v348
  %444 = vmatpush1.bf16.msra.mxu0 %v347
  %445 = vmatprep.subr.bf16.mxu0 %v350
  %446 = vmatpush1.bf16.msra.mxu0 %v349
  %447 = vmatprep.subr.bf16.mxu0 %v352
  %448 = vmatpush1.bf16.msra.mxu0 %v351
  %449 = vmatprep.subr.bf16.mxu0 %v354
  %450 = vmatpush1.bf16.msra.mxu0 %v353
  %451 = vmatprep.mubr.bf16.mxu0 %v96
  %452 = vmatmul.mubr.bf16.gmra.mrb[0].mxu0 %v95
  %v453 = vpop.f32.mrb[0].mxu0
  %v454 = vadd.f32 %v172, %v453
  %v455 = vpop.f32.mrb[0].mxu0
  %v456 = vadd.f32 %v176, %v455
  %v457 = vpop.f32.mrb[0].mxu0
  %v458 = vadd.f32 %v172, %v457
  %v459 = vpop.f32.mrb[0].mxu0
  %v460 = vadd.f32 %v176, %v459
  %461 = vmatprep.mubr.bf16.mxu0 %v99
  %462 = vmatmul.mubr.bf16.gmra.mrb[0].mxu0 %v98
  %v463 = vpop.f32.mrb[0].mxu0
  %v464 = vadd.f32 %v172, %v463
  %v465 = vpop.f32.mrb[0].mxu0
  %v466 = vadd.f32 %v176, %v465
  %v467 = vpop.f32.mrb[0].mxu0
  %v468 = vadd.f32 %v172, %v467
  %v469 = vpop.f32.mrb[0].mxu0
  %v470 = vadd.f32 %v176, %v469
  %471 = vmatprep.mubr.bf16.mxu0 %v102
  %472 = vmatmul.mubr.bf16.gmra.mrb[0].mxu0 %v101
  %v473 = vpop.f32.mrb[0].mxu0
  %v474 = vadd.f32 %v172, %v473
  %v475 = vpop.f32.mrb[0].mxu0
  %v476 = vadd.f32 %v176, %v475
  %v477 = vpop.f32.mrb[0].mxu0
  %v478 = vadd.f32 %v172, %v477
  %v479 = vpop.f32.mrb[0].mxu0
  %v480 = vadd.f32 %v176, %v479
  %481 = vmatprep.mubr.bf16.mxu0 %v105
  %482 = vmatmul.mubr.bf16.gmra.mrb[0].mxu0 %v104
  %v483 = vpop.f32.mrb[0].mxu0
  %v484 = vadd.f32 %v172, %v483
  %v485 = vpop.f32.mrb[0].mxu0
  %v486 = vadd.f32 %v176, %v485
  %v487 = vpop.f32.mrb[0].mxu0
  %v488 = vadd.f32 %v172, %v487
  %v489 = vpop.f32.mrb[0].mxu0
  %v490 = vadd.f32 %v176, %v489
  %491 = vmatprep.mubr.bf16.mxu0 %v108
  %492 = vmatmul.mubr.bf16.gmra.mrb[0].mxu0 %v107
  %v493 = vpop.f32.mrb[0].mxu0
  %v494 = vadd.f32 %v172, %v493
  %v495 = vpop.f32.mrb[0].mxu0
  %v496 = vadd.f32 %v176, %v495
  %v497 = vpop.f32.mrb[0].mxu0
  %v498 = vadd.f32 %v172, %v497
  %v499 = vpop.f32.mrb[0].mxu0
  %v500 = vadd.f32 %v176, %v499
  %501 = vmatprep.mubr.bf16.mxu0 %v111
  %502 = vmatmul.mubr.bf16.gmra.mrb[0].mxu0 %v110
  %v503 = vpop.f32.mrb[0].mxu0
  %v504 = vadd.f32 %v172, %v503
  %v505 = vpop.f32.mrb[0].mxu0
  %v506 = vadd.f32 %v176, %v505
  %v507 = vpop.f32.mrb[0].mxu0
  %v508 = vadd.f32 %v172, %v507
  %v509 = vpop.f32.mrb[0].mxu0
  %v510 = vadd.f32 %v176, %v509
  %511 = vmatprep.mubr.bf16.mxu0 %v114
  %512 = vmatmul.mubr.bf16.gmra.mrb[0].mxu0 %v113
  %v513 = vpop.f32.mrb[0].mxu0
  %v514 = vadd.f32 %v172, %v513
  %v515 = vpop.f32.mrb[0].mxu0
  %v516 = vadd.f32 %v176, %v515
  %v517 = vpop.f32.mrb[0].mxu0
  %v518 = vadd.f32 %v172, %v517
  %v519 = vpop.f32.mrb[0].mxu0
  %v520 = vadd.f32 %v176, %v519
  %521 = vmatprep.mubr.bf16.mxu0 %v117
  %522 = vmatmul.mubr.bf16.gmra.mrb[0].mxu0 %v116
  %v523 = vpop.f32.mrb[0].mxu0
  %v524 = vadd.f32 %v172, %v523
  %v525 = vpop.f32.mrb[0].mxu0
  %v526 = vadd.f32 %v176, %v525
  %v527 = vpop.f32.mrb[0].mxu0
  %v528 = vadd.f32 %v172, %v527
  %v529 = vpop.f32.mrb[0].mxu0
  %v530 = vadd.f32 %v176, %v529
  %531 = vdwg.mxu0
  %532 = vmatprep.subr.bf16.mxu0 %v356
  %533 = vmatpush1.bf16.msra.mxu0 %v355
  %534 = vmatprep.subr.bf16.mxu0 %v358
  %535 = vmatpush1.bf16.msra.mxu0 %v357
  %536 = vmatprep.subr.bf16.mxu0 %v360
  %537 = vmatpush1.bf16.msra.mxu0 %v359
  %538 = vmatprep.subr.bf16.mxu0 %v362
  %539 = vmatpush1.bf16.msra.mxu0 %v361
  %540 = vmatprep.subr.bf16.mxu0 %v364
  %541 = vmatpush1.bf16.msra.mxu0 %v363
  %542 = vmatprep.subr.bf16.mxu0 %v366
  %543 = vmatpush1.bf16.msra.mxu0 %v365
  %544 = vmatprep.subr.bf16.mxu0 %v368
  %545 = vmatpush1.bf16.msra.mxu0 %v367
  %546 = vmatprep.subr.bf16.mxu0 %v370
  %547 = vmatpush1.bf16.msra.mxu0 %v369
  %548 = vmatprep.subr.bf16.mxu0 0
  %549 = vmatpush1.bf16.msra.mxu0 0
  %550 = vmatprep.subr.bf16.mxu0 0
  %551 = vmatpush1.bf16.msra.mxu0 0
  %552 = vmatprep.subr.bf16.mxu0 0
  %553 = vmatpush1.bf16.msra.mxu0 0
  %554 = vmatprep.subr.bf16.mxu0 0
  %555 = vmatpush1.bf16.msra.mxu0 0
  %556 = vmatprep.subr.bf16.mxu0 0
  %557 = vmatpush1.bf16.msra.mxu0 0
  %558 = vmatprep.subr.bf16.mxu0 0
  %559 = vmatpush1.bf16.msra.mxu0 0
  %560 = vmatprep.subr.bf16.mxu0 0
  %561 = vmatpush1.bf16.msra.mxu0 0
  %562 = vmatprep.subr.bf16.mxu0 0
  %563 = vmatpush1.bf16.msra.mxu0 0
  %564 = vmatprep.mubr.bf16.mxu0 0
  %565 = vmatmul.mubr.bf16.gmra.mrb[0].mxu0 %v97
  %v566 = vpop.f32.mrb[0].mxu0
  %v567 = vadd.f32 %v454, %v566
  %v568 = vpop.f32.mrb[0].mxu0
  %v569 = vadd.f32 %v456, %v568
  %v570 = vpop.f32.mrb[0].mxu0
  %v571 = vadd.f32 %v458, %v570
  %v572 = vpop.f32.mrb[0].mxu0
  %v573 = vadd.f32 %v460, %v572
  %574 = vmatprep.mubr.bf16.mxu0 0
  %575 = vmatmul.mubr.bf16.gmra.mrb[0].mxu0 %v100
  %v576 = vpop.f32.mrb[0].mxu0
  %v577 = vadd.f32 %v464, %v576
  %v578 = vpop.f32.mrb[0].mxu0
  %v579 = vadd.f32 %v466, %v578
  %v580 = vpop.f32.mrb[0].mxu0
  %v581 = vadd.f32 %v468, %v580
  %v582 = vpop.f32.mrb[0].mxu0
  %v583 = vadd.f32 %v470, %v582
  %584 = vmatprep.mubr.bf16.mxu0 0
  %585 = vmatmul.mubr.bf16.gmra.mrb[0].mxu0 %v103
  %v586 = vpop.f32.mrb[0].mxu0
  %v587 = vadd.f32 %v474, %v586
  %v588 = vpop.f32.mrb[0].mxu0
  %v589 = vadd.f32 %v476, %v588
  %v590 = vpop.f32.mrb[0].mxu0
  %v591 = vadd.f32 %v478, %v590
  %v592 = vpop.f32.mrb[0].mxu0
  %v593 = vadd.f32 %v480, %v592
  %594 = vmatprep.mubr.bf16.mxu0 0
  %595 = vmatmul.mubr.bf16.gmra.mrb[0].mxu0 %v106
  %v596 = vpop.f32.mrb[0].mxu0
  %v597 = vadd.f32 %v484, %v596
  %v598 = vpop.f32.mrb[0].mxu0
  %v599 = vadd.f32 %v486, %v598
  %v600 = vpop.f32.mrb[0].mxu0
  %v601 = vadd.f32 %v488, %v600
  %v602 = vpop.f32.mrb[0].mxu0
  %v603 = vadd.f32 %v490, %v602
  %604 = vmatprep.mubr.bf16.mxu0 0
  %605 = vmatmul.mubr.bf16.gmra.mrb[0].mxu0 %v109
  %v606 = vpop.f32.mrb[0].mxu0
  %v607 = vadd.f32 %v494, %v606
  %v608 = vpop.f32.mrb[0].mxu0
  %v609 = vadd.f32 %v496, %v608
  %v610 = vpop.f32.mrb[0].mxu0
  %v611 = vadd.f32 %v498, %v610
  %v612 = vpop.f32.mrb[0].mxu0
  %v613 = vadd.f32 %v500, %v612
  %614 = vmatprep.mubr.bf16.mxu0 0
  %615 = vmatmul.mubr.bf16.gmra.mrb[0].mxu0 %v112
  %v616 = vpop.f32.mrb[0].mxu0
  %v617 = vadd.f32 %v504, %v616
  %v618 = vpop.f32.mrb[0].mxu0
  %v619 = vadd.f32 %v506, %v618
  %v620 = vpop.f32.mrb[0].mxu0
  %v621 = vadd.f32 %v508, %v620
  %v622 = vpop.f32.mrb[0].mxu0
  %v623 = vadd.f32 %v510, %v622
  %624 = vmatprep.mubr.bf16.mxu0 0
  %625 = vmatmul.mubr.bf16.gmra.mrb[0].mxu0 %v115
  %v626 = vpop.f32.mrb[0].mxu0
  %v627 = vadd.f32 %v514, %v626
  %v628 = vpop.f32.mrb[0].mxu0
  %v629 = vadd.f32 %v516, %v628
  %v630 = vpop.f32.mrb[0].mxu0
  %v631 = vadd.f32 %v518, %v630
  %v632 = vpop.f32.mrb[0].mxu0
  %v633 = vadd.f32 %v520, %v632
  %634 = vmatprep.mubr.bf16.mxu0 0
  %635 = vmatmul.mubr.bf16.gmra.mrb[0].mxu0 %v118
  %v636 = vpop.f32.mrb[0].mxu0
  %v637 = vadd.f32 %v524, %v636
  %v638 = vpop.f32.mrb[0].mxu0
  %v639 = vadd.f32 %v526, %v638
  %v640 = vpop.f32.mrb[0].mxu0
  %v641 = vadd.f32 %v528, %v640
  %v642 = vpop.f32.mrb[0].mxu0
  %v643 = vadd.f32 %v530, %v642
  %644 = vdwg.mxu0
  %v645 = vmax.f32 %v567, 0.0
  %v646 = vmax.f32 %v569, 0.0
  %v647 = vmax.f32 %v571, 0.0
  %v648 = vmax.f32 %v573, 0.0
  %v649 = vmax.f32 %v577, 0.0
  %v650 = vmax.f32 %v579, 0.0
  %v651 = vmax.f32 %v581, 0.0
  %v652 = vmax.f32 %v583, 0.0
  %v653 = vmax.f32 %v587, 0.0
  %v654 = vmax.f32 %v589, 0.0
  %v655 = vmax.f32 %v591, 0.0
  %v656 = vmax.f32 %v593, 0.0
  %v657 = vmax.f32 %v597, 0.0
  %v658 = vmax.f32 %v599, 0.0
  %v659 = vmax.f32 %v601, 0.0
  %v660 = vmax.f32 %v603, 0.0
  %v661 = vmax.f32 %v607, 0.0
  %v662 = vmax.f32 %v609, 0.0
  %v663 = vmax.f32 %v611, 0.0
  %v664 = vmax.f32 %v613, 0.0
  %v665 = vmax.f32 %v617, 0.0
  %v666 = vmax.f32 %v619, 0.0
  %v667 = vmax.f32 %v621, 0.0
  %v668 = vmax.f32 %v623, 0.0
  %v669 = vmax.f32 %v627, 0.0
  %v670 = vmax.f32 %v629, 0.0
  %v671 = vmax.f32 %v631, 0.0
  %v672 = vmax.f32 %v633, 0.0
  %v673 = vmax.f32 %v637, 0.0
  %v674 = vmax.f32 %v639, 0.0
  %v675 = vmax.f32 %v641, 0.0
  %v676 = vmax.f32 %v643, 0.0
  %v677 = vpack.c.bf16 %v647, %v645
  %v678 = vpack.c.bf16 %v648, %v646
  %v679 = vpack.c.bf16 %v651, %v649
  %v680 = vpack.c.bf16 %v652, %v650
  %v681 = vpack.c.bf16 %v655, %v653
  %v682 = vpack.c.bf16 %v656, %v654
  %v683 = vpack.c.bf16 %v659, %v657
  %v684 = vpack.c.bf16 %v660, %v658
  %v685 = vpack.c.bf16 %v663, %v661
  %v686 = vpack.c.bf16 %v664, %v662
  %v687 = vpack.c.bf16 %v667, %v665
  %v688 = vpack.c.bf16 %v668, %v666
  %v689 = vpack.c.bf16 %v671, %v669
  %v690 = vpack.c.bf16 %v672, %v670
  %v691 = vpack.c.bf16 %v675, %v673
  %v692 = vpack.c.bf16 %v676, %v674
  %v693 = vld [vmem:[%s3] sm:$0xf]
  %v694 = vld [vmem:[%s3 + $0x4] sm:$0xf]
  %v695 = vld [vmem:[%s3 + $0x8] sm:$0xf]
  %v696 = vld [vmem:[%s3 + $0xc] sm:$0xf]
  %v697 = vld [vmem:[%s3 + $0x10] sm:$0xf]
  %v698 = vld [vmem:[%s3 + $0x14] sm:$0xf]
  %v699 = vld [vmem:[%s3 + $0x18] sm:$0xf]
  %v700 = vld [vmem:[%s3 + $0x1c] sm:$0xf]
  %v701 = vld [vmem:[%s3 + $0x20] sm:$0xf]
  %v702 = vld [vmem:[%s3 + $0x24] sm:$0xf]
  %v703 = vld [vmem:[%s3 + $0x28] sm:$0xf]
  %v704 = vld [vmem:[%s3 + $0x2c] sm:$0xf]
  %v705 = vld [vmem:[%s3 + $0x30] sm:$0xf]
  %v706 = vld [vmem:[%s3 + $0x34] sm:$0xf]
  %v707 = vld [vmem:[%s3 + $0x38] sm:$0xf]
  %v708 = vld [vmem:[%s3 + $0x3c] sm:$0xf]
  %v709 = vld [vmem:[%s3 + $0x40] sm:$0xf]
  %v710 = vld [vmem:[%s3 + $0x44] sm:$0xf]
  %v711 = vld [vmem:[%s3 + $0x48] sm:$0xf]
  %v712 = vld [vmem:[%s3 + $0x4c] sm:$0xf]
  %v713 = vld [vmem:[%s3 + $0x50] sm:$0xf]
  %v714 = vld [vmem:[%s3 + $0x54] sm:$0xf]
  %v715 = vld [vmem:[%s3 + $0x58] sm:$0xf]
  %v716 = vld [vmem:[%s3 + $0x5c] sm:$0xf]
  %v717 = vld [vmem:[%s3 + $0x60] sm:$0xf]
  %v718 = vld [vmem:[%s3 + $0x64] sm:$0xf]
  %v719 = vld [vmem:[%s3 + $0x68] sm:$0xf]
  %v720 = vld [vmem:[%s3 + $0x6c] sm:$0xf]
  %v721 = vld [vmem:[%s3 + $0x70] sm:$0xf]
  %v722 = vld [vmem:[%s3 + $0x74] sm:$0xf]
  %v723 = vld [vmem:[%s3 + $0x78] sm:$0xf]
  %v724 = vld [vmem:[%s3 + $0x7c] sm:$0xf]
  %v725 = vld [vmem:[%s4] sm:$0x1]
  %v727 = vlaneseq
  %v728 = vshrl.u32 %v727, 7
  %v729 = vsub.s32 0, %v728
  %v730 = vrot.slane %v725, %v729
  %v764 = vunpack.c.l.b16 %v693
  %v765 = vunpack.c.l.b16 %v694
  %v766 = vunpack.c.l.b16 %v695
  %v767 = vunpack.c.l.b16 %v696
  %v768 = vunpack.c.l.b16 %v697
  %v769 = vunpack.c.l.b16 %v698
  %v770 = vunpack.c.l.b16 %v699
  %v771 = vunpack.c.l.b16 %v700
  %v772 = vunpack.c.l.b16 %v701
  %v773 = vunpack.c.l.b16 %v702
  %v774 = vunpack.c.l.b16 %v703
  %v775 = vunpack.c.l.b16 %v704
  %v776 = vunpack.c.l.b16 %v705
  %v777 = vunpack.c.l.b16 %v706
  %v778 = vunpack.c.l.b16 %v707
  %v779 = vunpack.c.l.b16 %v708
  %v780 = vunpack.c.l.b16 %v709
  %v781 = vunpack.c.l.b16 %v710
  %v782 = vunpack.c.l.b16 %v711
  %v783 = vunpack.c.l.b16 %v712
  %v784 = vunpack.c.l.b16 %v713
  %v785 = vunpack.c.l.b16 %v714
  %v786 = vunpack.c.l.b16 %v715
  %v787 = vunpack.c.l.b16 %v716
  %v788 = vunpack.c.l.b16 %v717
  %v789 = vunpack.c.l.b16 %v718
  %v790 = vunpack.c.l.b16 %v719
  %v791 = vunpack.c.l.b16 %v720
  %v792 = vunpack.c.l.b16 %v721
  %v793 = vunpack.c.l.b16 %v722
  %v794 = vunpack.c.l.b16 %v723
  %v795 = vunpack.c.l.b16 %v724
  %v796 = vpack.c.b16 %v765, %v764
  %v797 = vpack.c.b16 %v767, %v766
  %v798 = vpack.c.b16 %v769, %v768
  %v799 = vpack.c.b16 %v771, %v770
  %v800 = vpack.c.b16 %v773, %v772
  %v801 = vpack.c.b16 %v775, %v774
  %v802 = vpack.c.b16 %v777, %v776
  %v803 = vpack.c.b16 %v779, %v778
  %v804 = vpack.c.b16 %v781, %v780
  %v805 = vpack.c.b16 %v783, %v782
  %v806 = vpack.c.b16 %v785, %v784
  %v807 = vpack.c.b16 %v787, %v786
  %v808 = vpack.c.b16 %v789, %v788
  %v809 = vpack.c.b16 %v791, %v790
  %v810 = vpack.c.b16 %v793, %v792
  %v811 = vpack.c.b16 %v795, %v794
  %828 = vmatprep.subr.bf16.mxu0 0
  %829 = vmatpush1.bf16.msra.mxu0 %v796
  %830 = vmatprep.subr.bf16.mxu0 0
  %831 = vmatpush1.bf16.msra.mxu0 %v797
  %832 = vmatprep.subr.bf16.mxu0 0
  %833 = vmatpush1.bf16.msra.mxu0 %v798
  %834 = vmatprep.subr.bf16.mxu0 0
  %835 = vmatpush1.bf16.msra.mxu0 %v799
  %836 = vmatprep.subr.bf16.mxu0 0
  %837 = vmatpush1.bf16.msra.mxu0 %v800
  %838 = vmatprep.subr.bf16.mxu0 0
  %839 = vmatpush1.bf16.msra.mxu0 %v801
  %840 = vmatprep.subr.bf16.mxu0 0
  %841 = vmatpush1.bf16.msra.mxu0 %v802
  %842 = vmatprep.subr.bf16.mxu0 0
  %843 = vmatpush1.bf16.msra.mxu0 %v803
  %844 = vmatprep.subr.bf16.mxu0 0
  %845 = vmatpush1.bf16.msra.mxu0 %v804
  %846 = vmatprep.subr.bf16.mxu0 0
  %847 = vmatpush1.bf16.msra.mxu0 %v805
  %848 = vmatprep.subr.bf16.mxu0 0
  %849 = vmatpush1.bf16.msra.mxu0 %v806
  %850 = vmatprep.subr.bf16.mxu0 0
  %851 = vmatpush1.bf16.msra.mxu0 %v807
  %852 = vmatprep.subr.bf16.mxu0 0
  %853 = vmatpush1.bf16.msra.mxu0 %v808
  %854 = vmatprep.subr.bf16.mxu0 0
  %855 = vmatpush1.bf16.msra.mxu0 %v809
  %856 = vmatprep.subr.bf16.mxu0 0
  %857 = vmatpush1.bf16.msra.mxu0 %v810
  %858 = vmatprep.subr.bf16.mxu0 0
  %859 = vmatpush1.bf16.msra.mxu0 %v811
  %860 = vmatprep.mubr.bf16.mxu0 %v678
  %861 = vmatmul.mubr.bf16.gmra.mrb[0].mxu0 %v677
  %v862 = vpop.f32.mrb[0].mxu0
  %v863 = vadd.f32 %v730, %v862
  %v864 = vpop.f32.mrb[0].mxu0
  %v865 = vpop.f32.mrb[0].mxu0
  %v866 = vadd.f32 %v730, %v865
  %v867 = vpop.f32.mrb[0].mxu0
  %868 = vmatprep.mubr.bf16.mxu0 %v680
  %869 = vmatmul.mubr.bf16.gmra.mrb[0].mxu0 %v679
  %v870 = vpop.f32.mrb[0].mxu0
  %v871 = vadd.f32 %v730, %v870
  %v872 = vpop.f32.mrb[0].mxu0
  %v873 = vpop.f32.mrb[0].mxu0
  %v874 = vadd.f32 %v730, %v873
  %v875 = vpop.f32.mrb[0].mxu0
  %876 = vmatprep.mubr.bf16.mxu0 %v682
  %877 = vmatmul.mubr.bf16.gmra.mrb[0].mxu0 %v681
  %v878 = vpop.f32.mrb[0].mxu0
  %v879 = vadd.f32 %v730, %v878
  %v880 = vpop.f32.mrb[0].mxu0
  %v881 = vpop.f32.mrb[0].mxu0
  %v882 = vadd.f32 %v730, %v881
  %v883 = vpop.f32.mrb[0].mxu0
  %884 = vmatprep.mubr.bf16.mxu0 %v684
  %885 = vmatmul.mubr.bf16.gmra.mrb[0].mxu0 %v683
  %v886 = vpop.f32.mrb[0].mxu0
  %v887 = vadd.f32 %v730, %v886
  %v888 = vpop.f32.mrb[0].mxu0
  %v889 = vpop.f32.mrb[0].mxu0
  %v890 = vadd.f32 %v730, %v889
  %v891 = vpop.f32.mrb[0].mxu0
  %892 = vmatprep.mubr.bf16.mxu0 %v686
  %893 = vmatmul.mubr.bf16.gmra.mrb[0].mxu0 %v685
  %v894 = vpop.f32.mrb[0].mxu0
  %v895 = vadd.f32 %v730, %v894
  %v896 = vpop.f32.mrb[0].mxu0
  %v897 = vpop.f32.mrb[0].mxu0
  %v898 = vadd.f32 %v730, %v897
  %v899 = vpop.f32.mrb[0].mxu0
  %900 = vmatprep.mubr.bf16.mxu0 %v688
  %901 = vmatmul.mubr.bf16.gmra.mrb[0].mxu0 %v687
  %v902 = vpop.f32.mrb[0].mxu0
  %v903 = vadd.f32 %v730, %v902
  %v904 = vpop.f32.mrb[0].mxu0
  %v905 = vpop.f32.mrb[0].mxu0
  %v906 = vadd.f32 %v730, %v905
  %v907 = vpop.f32.mrb[0].mxu0
  %908 = vmatprep.mubr.bf16.mxu0 %v690
  %909 = vmatmul.mubr.bf16.gmra.mrb[0].mxu0 %v689
  %v910 = vpop.f32.mrb[0].mxu0
  %v911 = vadd.f32 %v730, %v910
  %v912 = vpop.f32.mrb[0].mxu0
  %v913 = vpop.f32.mrb[0].mxu0
  %v914 = vadd.f32 %v730, %v913
  %v915 = vpop.f32.mrb[0].mxu0
  %916 = vmatprep.mubr.bf16.mxu0 %v692
  %917 = vmatmul.mubr.bf16.gmra.mrb[0].mxu0 %v691
  %v918 = vpop.f32.mrb[0].mxu0
  %v919 = vadd.f32 %v730, %v918
  %v920 = vpop.f32.mrb[0].mxu0
  %v921 = vpop.f32.mrb[0].mxu0
  %v922 = vadd.f32 %v730, %v921
  %v923 = vpop.f32.mrb[0].mxu0
  %924 = vdwg.mxu0
  %v925 = vmul.f32 %v863, 0.5
  %v926 = vmul.f32 %v866, 0.5
  %v927 = vmul.f32 %v871, 0.5
  %v928 = vmul.f32 %v874, 0.5
  %v929 = vmul.f32 %v879, 0.5
  %v930 = vmul.f32 %v882, 0.5
  %v931 = vmul.f32 %v887, 0.5
  %v932 = vmul.f32 %v890, 0.5
  %v933 = vmul.f32 %v895, 0.5
  %v934 = vmul.f32 %v898, 0.5
  %v935 = vmul.f32 %v903, 0.5
  %v936 = vmul.f32 %v906, 0.5
  %v937 = vmul.f32 %v911, 0.5
  %v938 = vmul.f32 %v914, 0.5
  %v939 = vmul.f32 %v919, 0.5
  %v940 = vmul.f32 %v922, 0.5
  %v941 = vmul.f32 %v863, 0.044715
  %v942 = vmul.f32 %v866, 0.044715
  %v943 = vmul.f32 %v871, 0.044715
  %v944 = vmul.f32 %v874, 0.044715
  %v945 = vmul.f32 %v879, 0.044715
  %v946 = vmul.f32 %v882, 0.044715
  %v947 = vmul.f32 %v887, 0.044715
  %v948 = vmul.f32 %v890, 0.044715
  %v949 = vmul.f32 %v895, 0.044715
  %v950 = vmul.f32 %v898, 0.044715
  %v951 = vmul.f32 %v903, 0.044715
  %v952 = vmul.f32 %v906, 0.044715
  %v953 = vmul.f32 %v911, 0.044715
  %v954 = vmul.f32 %v914, 0.044715
  %v955 = vmul.f32 %v919, 0.044715
  %v956 = vmul.f32 %v922, 0.044715
  %v957 = vmul.f32 %v941, %v863
  %v958 = vmul.f32 %v942, %v866
  %v959 = vmul.f32 %v943, %v871
  %v960 = vmul.f32 %v944, %v874
  %v961 = vmul.f32 %v945, %v879
  %v962 = vmul.f32 %v946, %v882
  %v963 = vmul.f32 %v947, %v887
  %v964 = vmul.f32 %v948, %v890
  %v965 = vmul.f32 %v949, %v895
  %v966 = vmul.f32 %v950, %v898
  %v967 = vmul.f32 %v951, %v903
  %v968 = vmul.f32 %v952, %v906
  %v969 = vmul.f32 %v953, %v911
  %v970 = vmul.f32 %v954, %v914
  %v971 = vmul.f32 %v955, %v919
  %v972 = vmul.f32 %v956, %v922
  %v973 = vmul.f32 %v957, %v863
  %v974 = vmul.f32 %v958, %v866
  %v975 = vmul.f32 %v959, %v871
  %v976 = vmul.f32 %v960, %v874
  %v977 = vmul.f32 %v961, %v879
  %v978 = vmul.f32 %v962, %v882
  %v979 = vmul.f32 %v963, %v887
  %v980 = vmul.f32 %v964, %v890
  %v981 = vmul.f32 %v965, %v895
  %v982 = vmul.f32 %v966, %v898
  %v983 = vmul.f32 %v967, %v903
  %v984 = vmul.f32 %v968, %v906
  %v985 = vmul.f32 %v969, %v911
  %v986 = vmul.f32 %v970, %v914
  %v987 = vmul.f32 %v971, %v919
  %v988 = vmul.f32 %v972, %v922
  %v989 = vadd.f32 %v863, %v973
  %v990 = vadd.f32 %v866, %v974
  %v991 = vadd.f32 %v871, %v975
  %v992 = vadd.f32 %v874, %v976
  %v993 = vadd.f32 %v879, %v977
  %v994 = vadd.f32 %v882, %v978
  %v995 = vadd.f32 %v887, %v979
  %v996 = vadd.f32 %v890, %v980
  %v997 = vadd.f32 %v895, %v981
  %v998 = vadd.f32 %v898, %v982
  %v999 = vadd.f32 %v903, %v983
  %v1000 = vadd.f32 %v906, %v984
  %v1001 = vadd.f32 %v911, %v985
  %v1002 = vadd.f32 %v914, %v986
  %v1003 = vadd.f32 %v919, %v987
  %v1004 = vadd.f32 %v922, %v988
  %v1005 = vmul.f32 %v989, 0.7978846
  %v1006 = vmul.f32 %v990, 0.7978846
  %v1007 = vmul.f32 %v991, 0.7978846
  %v1008 = vmul.f32 %v992, 0.7978846
  %v1009 = vmul.f32 %v993, 0.7978846
  %v1010 = vmul.f32 %v994, 0.7978846
  %v1011 = vmul.f32 %v995, 0.7978846
  %v1012 = vmul.f32 %v996, 0.7978846
  %v1013 = vmul.f32 %v997, 0.7978846
  %v1014 = vmul.f32 %v998, 0.7978846
  %v1015 = vmul.f32 %v999, 0.7978846
  %v1016 = vmul.f32 %v1000, 0.7978846
  %v1017 = vmul.f32 %v1001, 0.7978846
  %v1018 = vmul.f32 %v1002, 0.7978846
  %v1019 = vmul.f32 %v1003, 0.7978846
  %v1020 = vmul.f32 %v1004, 0.7978846
  %v1021 = vtanh.pop %v1005
  %v1022 = vtanh.pop %v1006
  %v1023 = vtanh.pop %v1007
  %v1024 = vtanh.pop %v1008
  %v1025 = vtanh.pop %v1009
  %v1026 = vtanh.pop %v1010
  %v1027 = vtanh.pop %v1011
  %v1028 = vtanh.pop %v1012
  %v1029 = vtanh.pop %v1013
  %v1030 = vtanh.pop %v1014
  %v1031 = vtanh.pop %v1015
  %v1032 = vtanh.pop %v1016
  %v1033 = vtanh.pop %v1017
  %v1034 = vtanh.pop %v1018
  %v1035 = vtanh.pop %v1019
  %v1036 = vtanh.pop %v1020
  %v1037 = vadd.f32 %v1021, 1.0
  %v1038 = vadd.f32 %v1022, 1.0
  %v1039 = vadd.f32 %v1023, 1.0
  %v1040 = vadd.f32 %v1024, 1.0
  %v1041 = vadd.f32 %v1025, 1.0
  %v1042 = vadd.f32 %v1026, 1.0
  %v1043 = vadd.f32 %v1027, 1.0
  %v1044 = vadd.f32 %v1028, 1.0
  %v1045 = vadd.f32 %v1029, 1.0
  %v1046 = vadd.f32 %v1030, 1.0
  %v1047 = vadd.f32 %v1031, 1.0
  %v1048 = vadd.f32 %v1032, 1.0
  %v1049 = vadd.f32 %v1033, 1.0
  %v1050 = vadd.f32 %v1034, 1.0
  %v1051 = vadd.f32 %v1035, 1.0
  %v1052 = vadd.f32 %v1036, 1.0
  %v1053 = vmul.f32 %v925, %v1037
  %v1054 = vmul.f32 %v926, %v1038
  %v1055 = vmul.f32 %v927, %v1039
  %v1056 = vmul.f32 %v928, %v1040
  %v1057 = vmul.f32 %v929, %v1041
  %v1058 = vmul.f32 %v930, %v1042
  %v1059 = vmul.f32 %v931, %v1043
  %v1060 = vmul.f32 %v932, %v1044
  %v1061 = vmul.f32 %v933, %v1045
  %v1062 = vmul.f32 %v934, %v1046
  %v1063 = vmul.f32 %v935, %v1047
  %v1064 = vmul.f32 %v936, %v1048
  %v1065 = vmul.f32 %v937, %v1049
  %v1066 = vmul.f32 %v938, %v1050
  %v1067 = vmul.f32 %v939, %v1051
  %v1068 = vmul.f32 %v940, %v1052
  %v1069 = vpack.c.bf16 %v1054, %v1053
  %v1070 = vpack.c.bf16 %v1056, %v1055
  %v1071 = vpack.c.bf16 %v1058, %v1057
  %v1072 = vpack.c.bf16 %v1060, %v1059
  %v1073 = vpack.c.bf16 %v1062, %v1061
  %v1074 = vpack.c.bf16 %v1064, %v1063
  %v1075 = vpack.c.bf16 %v1066, %v1065
  %v1076 = vpack.c.bf16 %v1068, %v1067
  %v1077 = vld [vmem:[%s5] sm:$0xf]
  %v1078 = vld [vmem:[%s5 + $0x4] sm:$0xf]
  %v1079 = vld [vmem:[%s5 + $0x8] sm:$0xf]
  %v1080 = vld [vmem:[%s5 + $0xc] sm:$0xf]
  %v1081 = vld [vmem:[%s5 + $0x10] sm:$0xf]
  %v1082 = vld [vmem:[%s5 + $0x14] sm:$0xf]
  %v1083 = vld [vmem:[%s5 + $0x18] sm:$0xf]
  %v1084 = vld [vmem:[%s5 + $0x1c] sm:$0xf]
  %v1085 = vld [vmem:[%s5 + $0x20] sm:$0xf]
  %v1086 = vld [vmem:[%s5 + $0x24] sm:$0xf]
  %v1087 = vld [vmem:[%s5 + $0x28] sm:$0xf]
  %v1088 = vld [vmem:[%s5 + $0x2c] sm:$0xf]
  %v1089 = vld [vmem:[%s5 + $0x30] sm:$0xf]
  %v1090 = vld [vmem:[%s5 + $0x34] sm:$0xf]
  %v1091 = vld [vmem:[%s5 + $0x38] sm:$0xf]
  %v1092 = vld [vmem:[%s5 + $0x3c] sm:$0xf]
  %v1093 = vld [vmem:[%s6] sm:$0x1]
  %v1095 = vlaneseq
  %v1096 = vshrl.u32 %v1095, 7
  %v1097 = vsub.s32 0, %v1096
  %v1098 = vrot.slane %v1093, %v1097
  %v1116 = vunpack.c.l.b16 %v1077
  %v1117 = vunpack.c.l.b16 %v1078
  %v1118 = vunpack.c.l.b16 %v1079
  %v1119 = vunpack.c.l.b16 %v1080
  %v1120 = vunpack.c.l.b16 %v1081
  %v1121 = vunpack.c.l.b16 %v1082
  %v1122 = vunpack.c.l.b16 %v1083
  %v1123 = vunpack.c.l.b16 %v1084
  %v1124 = vunpack.c.l.b16 %v1085
  %v1125 = vunpack.c.l.b16 %v1086
  %v1126 = vunpack.c.l.b16 %v1087
  %v1127 = vunpack.c.l.b16 %v1088
  %v1128 = vunpack.c.l.b16 %v1089
  %v1129 = vunpack.c.l.b16 %v1090
  %v1130 = vunpack.c.l.b16 %v1091
  %v1131 = vunpack.c.l.b16 %v1092
  %v1132 = vpack.c.b16 %v1117, %v1116
  %v1133 = vpack.c.b16 %v1119, %v1118
  %v1134 = vpack.c.b16 %v1121, %v1120
  %v1135 = vpack.c.b16 %v1123, %v1122
  %v1136 = vpack.c.b16 %v1125, %v1124
  %v1137 = vpack.c.b16 %v1127, %v1126
  %v1138 = vpack.c.b16 %v1129, %v1128
  %v1139 = vpack.c.b16 %v1131, %v1130
  %1148 = vmatprep.subr.bf16.mxu0 0
  %1149 = vmatpush1.bf16.msra.mxu0 %v1132
  %1150 = vmatprep.subr.bf16.mxu0 0
  %1151 = vmatpush1.bf16.msra.mxu0 %v1133
  %1152 = vmatprep.subr.bf16.mxu0 0
  %1153 = vmatpush1.bf16.msra.mxu0 %v1134
  %1154 = vmatprep.subr.bf16.mxu0 0
  %1155 = vmatpush1.bf16.msra.mxu0 %v1135
  %1156 = vmatprep.subr.bf16.mxu0 0
  %1157 = vmatpush1.bf16.msra.mxu0 %v1136
  %1158 = vmatprep.subr.bf16.mxu0 0
  %1159 = vmatpush1.bf16.msra.mxu0 %v1137
  %1160 = vmatprep.subr.bf16.mxu0 0
  %1161 = vmatpush1.bf16.msra.mxu0 %v1138
  %1162 = vmatprep.subr.bf16.mxu0 0
  %1163 = vmatpush1.bf16.msra.mxu0 %v1139
  %1164 = vmatprep.subr.bf16.mxu0 0
  %1165 = vmatpush1.bf16.msra.mxu0 0
  %1166 = vmatprep.subr.bf16.mxu0 0
  %1167 = vmatpush1.bf16.msra.mxu0 0
  %1168 = vmatprep.subr.bf16.mxu0 0
  %1169 = vmatpush1.bf16.msra.mxu0 0
  %1170 = vmatprep.subr.bf16.mxu0 0
  %1171 = vmatpush1.bf16.msra.mxu0 0
  %1172 = vmatprep.subr.bf16.mxu0 0
  %1173 = vmatpush1.bf16.msra.mxu0 0
  %1174 = vmatprep.subr.bf16.mxu0 0
  %1175 = vmatpush1.bf16.msra.mxu0 0
  %1176 = vmatprep.subr.bf16.mxu0 0
  %1177 = vmatpush1.bf16.msra.mxu0 0
  %1178 = vmatprep.subr.bf16.mxu0 0
  %1179 = vmatpush1.bf16.msra.mxu0 0
  %1180 = vmatprep.mubr.bf16.mxu0 0
  %1181 = vmatmul.mubr.bf16.gmra.mrb[0].mxu0 %v1069
  %v1182 = vpop.f32.mrb[0].mxu0
  %v1183 = vadd.f32 %v1098, %v1182
  %v1184 = vpop.f32.mrb[0].mxu0
  %v1185 = vpop.f32.mrb[0].mxu0
  %v1186 = vadd.f32 %v1098, %v1185
  %v1187 = vpop.f32.mrb[0].mxu0
  %1188 = vmatprep.mubr.bf16.mxu0 0
  %1189 = vmatmul.mubr.bf16.gmra.mrb[0].mxu0 %v1070
  %v1190 = vpop.f32.mrb[0].mxu0
  %v1191 = vadd.f32 %v1098, %v1190
  %v1192 = vpop.f32.mrb[0].mxu0
  %v1193 = vpop.f32.mrb[0].mxu0
  %v1194 = vadd.f32 %v1098, %v1193
  %v1195 = vpop.f32.mrb[0].mxu0
  %1196 = vmatprep.mubr.bf16.mxu0 0
  %1197 = vmatmul.mubr.bf16.gmra.mrb[0].mxu0 %v1071
  %v1198 = vpop.f32.mrb[0].mxu0
  %v1199 = vadd.f32 %v1098, %v1198
  %v1200 = vpop.f32.mrb[0].mxu0
  %v1201 = vpop.f32.mrb[0].mxu0
  %v1202 = vadd.f32 %v1098, %v1201
  %v1203 = vpop.f32.mrb[0].mxu0
  %1204 = vmatprep.mubr.bf16.mxu0 0
  %1205 = vmatmul.mubr.bf16.gmra.mrb[0].mxu0 %v1072
  %v1206 = vpop.f32.mrb[0].mxu0
  %v1207 = vadd.f32 %v1098, %v1206
  %v1208 = vpop.f32.mrb[0].mxu0
  %v1209 = vpop.f32.mrb[0].mxu0
  %v1210 = vadd.f32 %v1098, %v1209
  %v1211 = vpop.f32.mrb[0].mxu0
  %1212 = vmatprep.mubr.bf16.mxu0 0
  %1213 = vmatmul.mubr.bf16.gmra.mrb[0].mxu0 %v1073
  %v1214 = vpop.f32.mrb[0].mxu0
  %v1215 = vadd.f32 %v1098, %v1214
  %v1216 = vpop.f32.mrb[0].mxu0
  %v1217 = vpop.f32.mrb[0].mxu0
  %v1218 = vadd.f32 %v1098, %v1217
  %v1219 = vpop.f32.mrb[0].mxu0
  %1220 = vmatprep.mubr.bf16.mxu0 0
  %1221 = vmatmul.mubr.bf16.gmra.mrb[0].mxu0 %v1074
  %v1222 = vpop.f32.mrb[0].mxu0
  %v1223 = vadd.f32 %v1098, %v1222
  %v1224 = vpop.f32.mrb[0].mxu0
  %v1225 = vpop.f32.mrb[0].mxu0
  %v1226 = vadd.f32 %v1098, %v1225
  %v1227 = vpop.f32.mrb[0].mxu0
  %1228 = vmatprep.mubr.bf16.mxu0 0
  %1229 = vmatmul.mubr.bf16.gmra.mrb[0].mxu0 %v1075
  %v1230 = vpop.f32.mrb[0].mxu0
  %v1231 = vadd.f32 %v1098, %v1230
  %v1232 = vpop.f32.mrb[0].mxu0
  %v1233 = vpop.f32.mrb[0].mxu0
  %v1234 = vadd.f32 %v1098, %v1233
  %v1235 = vpop.f32.mrb[0].mxu0
  %1236 = vmatprep.mubr.bf16.mxu0 0
  %1237 = vmatmul.mubr.bf16.gmra.mrb[0].mxu0 %v1076
  %v1238 = vpop.f32.mrb[0].mxu0
  %v1239 = vadd.f32 %v1098, %v1238
  %v1240 = vpop.f32.mrb[0].mxu0
  %v1241 = vpop.f32.mrb[0].mxu0
  %v1242 = vadd.f32 %v1098, %v1241
  %v1243 = vpop.f32.mrb[0].mxu0
  %1244 = vdwg.mxu0
  %1245 = vst [vmem:[%s14] sm:$0xff] %v1183
  %1246 = vst [vmem:[%s14 + $0x8] sm:$0xff] %v1186
  %1247 = vst [vmem:[%s14 + $0x10] sm:$0xff] %v1191
  %1248 = vst [vmem:[%s14 + $0x18] sm:$0xff] %v1194
  %1249 = vst [vmem:[%s14 + $0x20] sm:$0xff] %v1199
  %1250 = vst [vmem:[%s14 + $0x28] sm:$0xff] %v1202
  %1251 = vst [vmem:[%s14 + $0x30] sm:$0xff] %v1207
  %1252 = vst [vmem:[%s14 + $0x38] sm:$0xff] %v1210
  %1253 = vst [vmem:[%s14 + $0x40] sm:$0xff] %v1215
  %1254 = vst [vmem:[%s14 + $0x48] sm:$0xff] %v1218
  %1255 = vst [vmem:[%s14 + $0x50] sm:$0xff] %v1223
  %1256 = vst [vmem:[%s14 + $0x58] sm:$0xff] %v1226
  %1257 = vst [vmem:[%s14 + $0x60] sm:$0xff] %v1231
  %1258 = vst [vmem:[%s14 + $0x68] sm:$0xff] %v1234
  %1259 = vst [vmem:[%s14 + $0x70] sm:$0xff] %v1239
  %1260 = vst [vmem:[%s14 + $0x78] sm:$0xff] %v1242
  %v1261 = vpack.c.bf16 %v1186, %v1183
  %v1262 = vpack.c.bf16 %v1194, %v1191
  %v1263 = vpack.c.bf16 %v1202, %v1199
  %v1264 = vpack.c.bf16 %v1210, %v1207
  %v1265 = vpack.c.bf16 %v1218, %v1215
  %v1266 = vpack.c.bf16 %v1226, %v1223
  %v1267 = vpack.c.bf16 %v1234, %v1231
  %v1268 = vpack.c.bf16 %v1242, %v1239
  %v1269 = vld [vmem:[%s7] sm:$0xf]
  %v1270 = vld [vmem:[%s7 + $0x4] sm:$0xf]
  %v1271 = vld [vmem:[%s7 + $0x8] sm:$0xf]
  %v1272 = vld [vmem:[%s7 + $0xc] sm:$0xf]
  %v1273 = vld [vmem:[%s7 + $0x10] sm:$0xf]
  %v1274 = vld [vmem:[%s7 + $0x14] sm:$0xf]
  %v1275 = vld [vmem:[%s7 + $0x18] sm:$0xf]
  %v1276 = vld [vmem:[%s7 + $0x1c] sm:$0xf]
  %v1277 = vld [vmem:[%s7 + $0x20] sm:$0xf]
  %v1278 = vld [vmem:[%s7 + $0x24] sm:$0xf]
  %v1279 = vld [vmem:[%s7 + $0x28] sm:$0xf]
  %v1280 = vld [vmem:[%s7 + $0x2c] sm:$0xf]
  %v1281 = vld [vmem:[%s7 + $0x30] sm:$0xf]
  %v1282 = vld [vmem:[%s7 + $0x34] sm:$0xf]
  %v1283 = vld [vmem:[%s7 + $0x38] sm:$0xf]
  %v1284 = vld [vmem:[%s7 + $0x3c] sm:$0xf]
  %v1285 = vld [vmem:[%s8] sm:$0x1]
  %v1287 = vlaneseq
  %v1288 = vshrl.u32 %v1287, 7
  %v1289 = vsub.s32 0, %v1288
  %v1290 = vrot.slane %v1285, %v1289
  %v1308 = vunpack.c.l.b16 %v1269
  %v1309 = vunpack.c.l.b16 %v1270
  %v1310 = vunpack.c.l.b16 %v1271
  %v1311 = vunpack.c.l.b16 %v1272
  %v1312 = vunpack.c.l.b16 %v1273
  %v1313 = vunpack.c.l.b16 %v1274
  %v1314 = vunpack.c.l.b16 %v1275
  %v1315 = vunpack.c.l.b16 %v1276
  %v1316 = vunpack.c.l.b16 %v1277
  %v1317 = vunpack.c.l.b16 %v1278
  %v1318 = vunpack.c.l.b16 %v1279
  %v1319 = vunpack.c.l.b16 %v1280
  %v1320 = vunpack.c.l.b16 %v1281
  %v1321 = vunpack.c.l.b16 %v1282
  %v1322 = vunpack.c.l.b16 %v1283
  %v1323 = vunpack.c.l.b16 %v1284
  %v1324 = vpack.c.b16 %v1309, %v1308
  %v1325 = vpack.c.b16 %v1311, %v1310
  %v1326 = vpack.c.b16 %v1313, %v1312
  %v1327 = vpack.c.b16 %v1315, %v1314
  %v1328 = vpack.c.b16 %v1317, %v1316
  %v1329 = vpack.c.b16 %v1319, %v1318
  %v1330 = vpack.c.b16 %v1321, %v1320
  %v1331 = vpack.c.b16 %v1323, %v1322
  %1340 = vmatprep.subr.bf16.mxu0 0
  %1341 = vmatpush1.bf16.msra.mxu0 %v1324
  %1342 = vmatprep.subr.bf16.mxu0 0
  %1343 = vmatpush1.bf16.msra.mxu0 %v1325
  %1344 = vmatprep.subr.bf16.mxu0 0
  %1345 = vmatpush1.bf16.msra.mxu0 %v1326
  %1346 = vmatprep.subr.bf16.mxu0 0
  %1347 = vmatpush1.bf16.msra.mxu0 %v1327
  %1348 = vmatprep.subr.bf16.mxu0 0
  %1349 = vmatpush1.bf16.msra.mxu0 %v1328
  %1350 = vmatprep.subr.bf16.mxu0 0
  %1351 = vmatpush1.bf16.msra.mxu0 %v1329
  %1352 = vmatprep.subr.bf16.mxu0 0
  %1353 = vmatpush1.bf16.msra.mxu0 %v1330
  %1354 = vmatprep.subr.bf16.mxu0 0
  %1355 = vmatpush1.bf16.msra.mxu0 %v1331
  %1356 = vmatprep.subr.bf16.mxu0 0
  %1357 = vmatpush1.bf16.msra.mxu0 0
  %1358 = vmatprep.subr.bf16.mxu0 0
  %1359 = vmatpush1.bf16.msra.mxu0 0
  %1360 = vmatprep.subr.bf16.mxu0 0
  %1361 = vmatpush1.bf16.msra.mxu0 0
  %1362 = vmatprep.subr.bf16.mxu0 0
  %1363 = vmatpush1.bf16.msra.mxu0 0
  %1364 = vmatprep.subr.bf16.mxu0 0
  %1365 = vmatpush1.bf16.msra.mxu0 0
  %1366 = vmatprep.subr.bf16.mxu0 0
  %1367 = vmatpush1.bf16.msra.mxu0 0
  %1368 = vmatprep.subr.bf16.mxu0 0
  %1369 = vmatpush1.bf16.msra.mxu0 0
  %1370 = vmatprep.subr.bf16.mxu0 0
  %1371 = vmatpush1.bf16.msra.mxu0 0
  %1372 = vmatprep.mubr.bf16.mxu0 0
  %1373 = vmatmul.mubr.bf16.gmra.mrb[0].mxu0 %v1261
  %v1374 = vpop.f32.mrb[0].mxu0
  %v1375 = vadd.f32 %v1290, %v1374
  %v1376 = vpop.f32.mrb[0].mxu0
  %v1377 = vpop.f32.mrb[0].mxu0
  %v1378 = vadd.f32 %v1290, %v1377
  %v1379 = vpop.f32.mrb[0].mxu0
  %1380 = vmatprep.mubr.bf16.mxu0 0
  %1381 = vmatmul.mubr.bf16.gmra.mrb[0].mxu0 %v1262
  %v1382 = vpop.f32.mrb[0].mxu0
  %v1383 = vadd.f32 %v1290, %v1382
  %v1384 = vpop.f32.mrb[0].mxu0
  %v1385 = vpop.f32.mrb[0].mxu0
  %v1386 = vadd.f32 %v1290, %v1385
  %v1387 = vpop.f32.mrb[0].mxu0
  %1388 = vmatprep.mubr.bf16.mxu0 0
  %1389 = vmatmul.mubr.bf16.gmra.mrb[0].mxu0 %v1263
  %v1390 = vpop.f32.mrb[0].mxu0
  %v1391 = vadd.f32 %v1290, %v1390
  %v1392 = vpop.f32.mrb[0].mxu0
  %v1393 = vpop.f32.mrb[0].mxu0
  %v1394 = vadd.f32 %v1290, %v1393
  %v1395 = vpop.f32.mrb[0].mxu0
  %1396 = vmatprep.mubr.bf16.mxu0 0
  %1397 = vmatmul.mubr.bf16.gmra.mrb[0].mxu0 %v1264
  %v1398 = vpop.f32.mrb[0].mxu0
  %v1399 = vadd.f32 %v1290, %v1398
  %v1400 = vpop.f32.mrb[0].mxu0
  %v1401 = vpop.f32.mrb[0].mxu0
  %v1402 = vadd.f32 %v1290, %v1401
  %v1403 = vpop.f32.mrb[0].mxu0
  %1404 = vmatprep.mubr.bf16.mxu0 0
  %1405 = vmatmul.mubr.bf16.gmra.mrb[0].mxu0 %v1265
  %v1406 = vpop.f32.mrb[0].mxu0
  %v1407 = vadd.f32 %v1290, %v1406
  %v1408 = vpop.f32.mrb[0].mxu0
  %v1409 = vpop.f32.mrb[0].mxu0
  %v1410 = vadd.f32 %v1290, %v1409
  %v1411 = vpop.f32.mrb[0].mxu0
  %1412 = vmatprep.mubr.bf16.mxu0 0
  %1413 = vmatmul.mubr.bf16.gmra.mrb[0].mxu0 %v1266
  %v1414 = vpop.f32.mrb[0].mxu0
  %v1415 = vadd.f32 %v1290, %v1414
  %v1416 = vpop.f32.mrb[0].mxu0
  %v1417 = vpop.f32.mrb[0].mxu0
  %v1418 = vadd.f32 %v1290, %v1417
  %v1419 = vpop.f32.mrb[0].mxu0
  %1420 = vmatprep.mubr.bf16.mxu0 0
  %1421 = vmatmul.mubr.bf16.gmra.mrb[0].mxu0 %v1267
  %v1422 = vpop.f32.mrb[0].mxu0
  %v1423 = vadd.f32 %v1290, %v1422
  %v1424 = vpop.f32.mrb[0].mxu0
  %v1425 = vpop.f32.mrb[0].mxu0
  %v1426 = vadd.f32 %v1290, %v1425
  %v1427 = vpop.f32.mrb[0].mxu0
  %1428 = vmatprep.mubr.bf16.mxu0 0
  %1429 = vmatmul.mubr.bf16.gmra.mrb[0].mxu0 %v1268
  %v1430 = vpop.f32.mrb[0].mxu0
  %v1431 = vadd.f32 %v1290, %v1430
  %v1432 = vpop.f32.mrb[0].mxu0
  %v1433 = vpop.f32.mrb[0].mxu0
  %v1434 = vadd.f32 %v1290, %v1433
  %v1435 = vpop.f32.mrb[0].mxu0
  %1436 = vdwg.mxu0
  %v1437 = vmax.f32 %v1375, 0.0
  %v1438 = vmax.f32 %v1378, 0.0
  %v1439 = vmax.f32 %v1383, 0.0
  %v1440 = vmax.f32 %v1386, 0.0
  %v1441 = vmax.f32 %v1391, 0.0
  %v1442 = vmax.f32 %v1394, 0.0
  %v1443 = vmax.f32 %v1399, 0.0
  %v1444 = vmax.f32 %v1402, 0.0
  %v1445 = vmax.f32 %v1407, 0.0
  %v1446 = vmax.f32 %v1410, 0.0
  %v1447 = vmax.f32 %v1415, 0.0
  %v1448 = vmax.f32 %v1418, 0.0
  %v1449 = vmax.f32 %v1423, 0.0
  %v1450 = vmax.f32 %v1426, 0.0
  %v1451 = vmax.f32 %v1431, 0.0
  %v1452 = vmax.f32 %v1434, 0.0
  %v1453 = vpack.c.bf16 %v1438, %v1437
  %v1454 = vpack.c.bf16 %v1440, %v1439
  %v1455 = vpack.c.bf16 %v1442, %v1441
  %v1456 = vpack.c.bf16 %v1444, %v1443
  %v1457 = vpack.c.bf16 %v1446, %v1445
  %v1458 = vpack.c.bf16 %v1448, %v1447
  %v1459 = vpack.c.bf16 %v1450, %v1449
  %v1460 = vpack.c.bf16 %v1452, %v1451
  %v1461 = vld [vmem:[%s9] sm:$0xff]
  %v1462 = vld [vmem:[%s9 + $0x8] sm:$0xff]
  %v1463 = vld [vmem:[%s9 + $0x10] sm:$0xff]
  %v1464 = vld [vmem:[%s9 + $0x18] sm:$0xff]
  %v1465 = vld [vmem:[%s9 + $0x20] sm:$0xff]
  %v1466 = vld [vmem:[%s9 + $0x28] sm:$0xff]
  %v1467 = vld [vmem:[%s9 + $0x30] sm:$0xff]
  %v1468 = vld [vmem:[%s9 + $0x38] sm:$0xff]
  %v1469 = vld [vmem:[%s9 + $0x40] sm:$0xff]
  %v1470 = vld [vmem:[%s9 + $0x48] sm:$0xff]
  %v1471 = vld [vmem:[%s9 + $0x50] sm:$0xff]
  %v1472 = vld [vmem:[%s9 + $0x58] sm:$0xff]
  %v1473 = vld [vmem:[%s9 + $0x60] sm:$0xff]
  %v1474 = vld [vmem:[%s9 + $0x68] sm:$0xff]
  %v1475 = vld [vmem:[%s9 + $0x70] sm:$0xff]
  %v1476 = vld [vmem:[%s9 + $0x78] sm:$0xff]
  %v1477 = vld [vmem:[%s10] sm:$0x3]
  %v1479 = vlaneseq
  %v1480 = vshrl.u32 %v1479, 7
  %v1481 = vsub.s32 0, %v1480
  %v1482 = vrot.slane %v1477, %v1481
  %v1483 = vlaneseq
  %v1484 = vshrl.u32 %v1483, 7
  %v1485 = vsub.s32 1, %v1484
  %v1486 = vrot.slane %v1477, %v1485
  %v1505 = vunpack.c.l.b16 %v1461
  %v1506 = vunpack.c.h.b16 %v1461
  %v1507 = vunpack.c.l.b16 %v1462
  %v1508 = vunpack.c.h.b16 %v1462
  %v1509 = vunpack.c.l.b16 %v1463
  %v1510 = vunpack.c.h.b16 %v1463
  %v1511 = vunpack.c.l.b16 %v1464
  %v1512 = vunpack.c.h.b16 %v1464
  %v1513 = vunpack.c.l.b16 %v1465
  %v1514 = vunpack.c.h.b16 %v1465
  %v1515 = vunpack.c.l.b16 %v1466
  %v1516 = vunpack.c.h.b16 %v1466
  %v1517 = vunpack.c.l.b16 %v1467
  %v1518 = vunpack.c.h.b16 %v1467
  %v1519 = vunpack.c.l.b16 %v1468
  %v1520 = vunpack.c.h.b16 %v1468
  %v1521 = vunpack.c.l.b16 %v1469
  %v1522 = vunpack.c.h.b16 %v1469
  %v1523 = vunpack.c.l.b16 %v1470
  %v1524 = vunpack.c.h.b16 %v1470
  %v1525 = vunpack.c.l.b16 %v1471
  %v1526 = vunpack.c.h.b16 %v1471
  %v1527 = vunpack.c.l.b16 %v1472
  %v1528 = vunpack.c.h.b16 %v1472
  %v1529 = vunpack.c.l.b16 %v1473
  %v1530 = vunpack.c.h.b16 %v1473
  %v1531 = vunpack.c.l.b16 %v1474
  %v1532 = vunpack.c.h.b16 %v1474
  %v1533 = vunpack.c.l.b16 %v1475
  %v1534 = vunpack.c.h.b16 %v1475
  %v1535 = vunpack.c.l.b16 %v1476
  %v1536 = vunpack.c.h.b16 %v1476
  %v1537 = vpack.c.b16 %v1507, %v1505
  %v1538 = vpack.c.b16 %v1508, %v1506
  %v1539 = vpack.c.b16 %v1511, %v1509
  %v1540 = vpack.c.b16 %v1512, %v1510
  %v1541 = vpack.c.b16 %v1515, %v1513
  %v1542 = vpack.c.b16 %v1516, %v1514
  %v1543 = vpack.c.b16 %v1519, %v1517
  %v1544 = vpack.c.b16 %v1520, %v1518
  %v1545 = vpack.c.b16 %v1523, %v1521
  %v1546 = vpack.c.b16 %v1524, %v1522
  %v1547 = vpack.c.b16 %v1527, %v1525
  %v1548 = vpack.c.b16 %v1528, %v1526
  %v1549 = vpack.c.b16 %v1531, %v1529
  %v1550 = vpack.c.b16 %v1532, %v1530
  %v1551 = vpack.c.b16 %v1535, %v1533
  %v1552 = vpack.c.b16 %v1536, %v1534
  %1569 = vmatprep.subr.bf16.mxu0 %v1538
  %1570 = vmatpush1.bf16.msra.mxu0 %v1537
  %1571 = vmatprep.subr.bf16.mxu0 %v1540
  %1572 = vmatpush1.bf16.msra.mxu0 %v1539
  %1573 = vmatprep.subr.bf16.mxu0 %v1542
  %1574 = vmatpush1.bf16.msra.mxu0 %v1541
  %1575 = vmatprep.subr.bf16.mxu0 %v1544
  %1576 = vmatpush1.bf16.msra.mxu0 %v1543
  %1577 = vmatprep.subr.bf16.mxu0 %v1546
  %1578 = vmatpush1.bf16.msra.mxu0 %v1545
  %1579 = vmatprep.subr.bf16.mxu0 %v1548
  %1580 = vmatpush1.bf16.msra.mxu0 %v1547
  %1581 = vmatprep.subr.bf16.mxu0 %v1550
  %1582 = vmatpush1.bf16.msra.mxu0 %v1549
  %1583 = vmatprep.subr.bf16.mxu0 %v1552
  %1584 = vmatpush1.bf16.msra.mxu0 %v1551
  %1585 = vmatprep.subr.bf16.mxu0 0
  %1586 = vmatpush1.bf16.msra.mxu0 0
  %1587 = vmatprep.subr.bf16.mxu0 0
  %1588 = vmatpush1.bf16.msra.mxu0 0
  %1589 = vmatprep.subr.bf16.mxu0 0
  %1590 = vmatpush1.bf16.msra.mxu0 0
  %1591 = vmatprep.subr.bf16.mxu0 0
  %1592 = vmatpush1.bf16.msra.mxu0 0
  %1593 = vmatprep.subr.bf16.mxu0 0
  %1594 = vmatpush1.bf16.msra.mxu0 0
  %1595 = vmatprep.subr.bf16.mxu0 0
  %1596 = vmatpush1.bf16.msra.mxu0 0
  %1597 = vmatprep.subr.bf16.mxu0 0
  %1598 = vmatpush1.bf16.msra.mxu0 0
  %1599 = vmatprep.subr.bf16.mxu0 0
  %1600 = vmatpush1.bf16.msra.mxu0 0
  %1601 = vmatprep.mubr.bf16.mxu0 0
  %1602 = vmatmul.mubr.bf16.gmra.mrb[0].mxu0 %v1453
  %v1603 = vpop.f32.mrb[0].mxu0
  %v1604 = vadd.f32 %v1482, %v1603
  %v1605 = vpop.f32.mrb[0].mxu0
  %v1606 = vadd.f32 %v1486, %v1605
  %v1607 = vpop.f32.mrb[0].mxu0
  %v1608 = vadd.f32 %v1482, %v1607
  %v1609 = vpop.f32.mrb[0].mxu0
  %v1610 = vadd.f32 %v1486, %v1609
  %1611 = vmatprep.mubr.bf16.mxu0 0
  %1612 = vmatmul.mubr.bf16.gmra.mrb[0].mxu0 %v1454
  %v1613 = vpop.f32.mrb[0].mxu0
  %v1614 = vadd.f32 %v1482, %v1613
  %v1615 = vpop.f32.mrb[0].mxu0
  %v1616 = vadd.f32 %v1486, %v1615
  %v1617 = vpop.f32.mrb[0].mxu0
  %v1618 = vadd.f32 %v1482, %v1617
  %v1619 = vpop.f32.mrb[0].mxu0
  %v1620 = vadd.f32 %v1486, %v1619
  %1621 = vmatprep.mubr.bf16.mxu0 0
  %1622 = vmatmul.mubr.bf16.gmra.mrb[0].mxu0 %v1455
  %v1623 = vpop.f32.mrb[0].mxu0
  %v1624 = vadd.f32 %v1482, %v1623
  %v1625 = vpop.f32.mrb[0].mxu0
  %v1626 = vadd.f32 %v1486, %v1625
  %v1627 = vpop.f32.mrb[0].mxu0
  %v1628 = vadd.f32 %v1482, %v1627
  %v1629 = vpop.f32.mrb[0].mxu0
  %v1630 = vadd.f32 %v1486, %v1629
  %1631 = vmatprep.mubr.bf16.mxu0 0
  %1632 = vmatmul.mubr.bf16.gmra.mrb[0].mxu0 %v1456
  %v1633 = vpop.f32.mrb[0].mxu0
  %v1634 = vadd.f32 %v1482, %v1633
  %v1635 = vpop.f32.mrb[0].mxu0
  %v1636 = vadd.f32 %v1486, %v1635
  %v1637 = vpop.f32.mrb[0].mxu0
  %v1638 = vadd.f32 %v1482, %v1637
  %v1639 = vpop.f32.mrb[0].mxu0
  %v1640 = vadd.f32 %v1486, %v1639
  %1641 = vmatprep.mubr.bf16.mxu0 0
  %1642 = vmatmul.mubr.bf16.gmra.mrb[0].mxu0 %v1457
  %v1643 = vpop.f32.mrb[0].mxu0
  %v1644 = vadd.f32 %v1482, %v1643
  %v1645 = vpop.f32.mrb[0].mxu0
  %v1646 = vadd.f32 %v1486, %v1645
  %v1647 = vpop.f32.mrb[0].mxu0
  %v1648 = vadd.f32 %v1482, %v1647
  %v1649 = vpop.f32.mrb[0].mxu0
  %v1650 = vadd.f32 %v1486, %v1649
  %1651 = vmatprep.mubr.bf16.mxu0 0
  %1652 = vmatmul.mubr.bf16.gmra.mrb[0].mxu0 %v1458
  %v1653 = vpop.f32.mrb[0].mxu0
  %v1654 = vadd.f32 %v1482, %v1653
  %v1655 = vpop.f32.mrb[0].mxu0
  %v1656 = vadd.f32 %v1486, %v1655
  %v1657 = vpop.f32.mrb[0].mxu0
  %v1658 = vadd.f32 %v1482, %v1657
  %v1659 = vpop.f32.mrb[0].mxu0
  %v1660 = vadd.f32 %v1486, %v1659
  %1661 = vmatprep.mubr.bf16.mxu0 0
  %1662 = vmatmul.mubr.bf16.gmra.mrb[0].mxu0 %v1459
  %v1663 = vpop.f32.mrb[0].mxu0
  %v1664 = vadd.f32 %v1482, %v1663
  %v1665 = vpop.f32.mrb[0].mxu0
  %v1666 = vadd.f32 %v1486, %v1665
  %v1667 = vpop.f32.mrb[0].mxu0
  %v1668 = vadd.f32 %v1482, %v1667
  %v1669 = vpop.f32.mrb[0].mxu0
  %v1670 = vadd.f32 %v1486, %v1669
  %1671 = vmatprep.mubr.bf16.mxu0 0
  %1672 = vmatmul.mubr.bf16.gmra.mrb[0].mxu0 %v1460
  %v1673 = vpop.f32.mrb[0].mxu0
  %v1674 = vadd.f32 %v1482, %v1673
  %v1675 = vpop.f32.mrb[0].mxu0
  %v1676 = vadd.f32 %v1486, %v1675
  %v1677 = vpop.f32.mrb[0].mxu0
  %v1678 = vadd.f32 %v1482, %v1677
  %v1679 = vpop.f32.mrb[0].mxu0
  %v1680 = vadd.f32 %v1486, %v1679
  %1681 = vdwg.mxu0
  %v1682 = vmul.f32 %v1604, 0.5
  %v1683 = vmul.f32 %v1606, 0.5
  %v1684 = vmul.f32 %v1608, 0.5
  %v1685 = vmul.f32 %v1610, 0.5
  %v1686 = vmul.f32 %v1614, 0.5
  %v1687 = vmul.f32 %v1616, 0.5
  %v1688 = vmul.f32 %v1618, 0.5
  %v1689 = vmul.f32 %v1620, 0.5
  %v1690 = vmul.f32 %v1624, 0.5
  %v1691 = vmul.f32 %v1626, 0.5
  %v1692 = vmul.f32 %v1628, 0.5
  %v1693 = vmul.f32 %v1630, 0.5
  %v1694 = vmul.f32 %v1634, 0.5
  %v1695 = vmul.f32 %v1636, 0.5
  %v1696 = vmul.f32 %v1638, 0.5
  %v1697 = vmul.f32 %v1640, 0.5
  %v1698 = vmul.f32 %v1644, 0.5
  %v1699 = vmul.f32 %v1646, 0.5
  %v1700 = vmul.f32 %v1648, 0.5
  %v1701 = vmul.f32 %v1650, 0.5
  %v1702 = vmul.f32 %v1654, 0.5
  %v1703 = vmul.f32 %v1656, 0.5
  %v1704 = vmul.f32 %v1658, 0.5
  %v1705 = vmul.f32 %v1660, 0.5
  %v1706 = vmul.f32 %v1664, 0.5
  %v1707 = vmul.f32 %v1666, 0.5
  %v1708 = vmul.f32 %v1668, 0.5
  %v1709 = vmul.f32 %v1670, 0.5
  %v1710 = vmul.f32 %v1674, 0.5
  %v1711 = vmul.f32 %v1676, 0.5
  %v1712 = vmul.f32 %v1678, 0.5
  %v1713 = vmul.f32 %v1680, 0.5
  %v1714 = vmul.f32 %v1604, 0.044715
  %v1715 = vmul.f32 %v1606, 0.044715
  %v1716 = vmul.f32 %v1608, 0.044715
  %v1717 = vmul.f32 %v1610, 0.044715
  %v1718 = vmul.f32 %v1614, 0.044715
  %v1719 = vmul.f32 %v1616, 0.044715
  %v1720 = vmul.f32 %v1618, 0.044715
  %v1721 = vmul.f32 %v1620, 0.044715
  %v1722 = vmul.f32 %v1624, 0.044715
  %v1723 = vmul.f32 %v1626, 0.044715
  %v1724 = vmul.f32 %v1628, 0.044715
  %v1725 = vmul.f32 %v1630, 0.044715
  %v1726 = vmul.f32 %v1634, 0.044715
  %v1727 = vmul.f32 %v1636, 0.044715
  %v1728 = vmul.f32 %v1638, 0.044715
  %v1729 = vmul.f32 %v1640, 0.044715
  %v1730 = vmul.f32 %v1644, 0.044715
  %v1731 = vmul.f32 %v1646, 0.044715
  %v1732 = vmul.f32 %v1648, 0.044715
  %v1733 = vmul.f32 %v1650, 0.044715
  %v1734 = vmul.f32 %v1654, 0.044715
  %v1735 = vmul.f32 %v1656, 0.044715
  %v1736 = vmul.f32 %v1658, 0.044715
  %v1737 = vmul.f32 %v1660, 0.044715
  %v1738 = vmul.f32 %v1664, 0.044715
  %v1739 = vmul.f32 %v1666, 0.044715
  %v1740 = vmul.f32 %v1668, 0.044715
  %v1741 = vmul.f32 %v1670, 0.044715
  %v1742 = vmul.f32 %v1674, 0.044715
  %v1743 = vmul.f32 %v1676, 0.044715
  %v1744 = vmul.f32 %v1678, 0.044715
  %v1745 = vmul.f32 %v1680, 0.044715
  %v1746 = vmul.f32 %v1714, %v1604
  %v1747 = vmul.f32 %v1715, %v1606
  %v1748 = vmul.f32 %v1716, %v1608
  %v1749 = vmul.f32 %v1717, %v1610
  %v1750 = vmul.f32 %v1718, %v1614
  %v1751 = vmul.f32 %v1719, %v1616
  %v1752 = vmul.f32 %v1720, %v1618
  %v1753 = vmul.f32 %v1721, %v1620
  %v1754 = vmul.f32 %v1722, %v1624
  %v1755 = vmul.f32 %v1723, %v1626
  %v1756 = vmul.f32 %v1724, %v1628
  %v1757 = vmul.f32 %v1725, %v1630
  %v1758 = vmul.f32 %v1726, %v1634
  %v1759 = vmul.f32 %v1727, %v1636
  %v1760 = vmul.f32 %v1728, %v1638
  %v1761 = vmul.f32 %v1729, %v1640
  %v1762 = vmul.f32 %v1730, %v1644
  %v1763 = vmul.f32 %v1731, %v1646
  %v1764 = vmul.f32 %v1732, %v1648
  %v1765 = vmul.f32 %v1733, %v1650
  %v1766 = vmul.f32 %v1734, %v1654
  %v1767 = vmul.f32 %v1735, %v1656
  %v1768 = vmul.f32 %v1736, %v1658
  %v1769 = vmul.f32 %v1737, %v1660
  %v1770 = vmul.f32 %v1738, %v1664
  %v1771 = vmul.f32 %v1739, %v1666
  %v1772 = vmul.f32 %v1740, %v1668
  %v1773 = vmul.f32 %v1741, %v1670
  %v1774 = vmul.f32 %v1742, %v1674
  %v1775 = vmul.f32 %v1743, %v1676
  %v1776 = vmul.f32 %v1744, %v1678
  %v1777 = vmul.f32 %v1745, %v1680
  %v1778 = vmul.f32 %v1746, %v1604
  %v1779 = vmul.f32 %v1747, %v1606
  %v1780 = vmul.f32 %v1748, %v1608
  %v1781 = vmul.f32 %v1749, %v1610
  %v1782 = vmul.f32 %v1750, %v1614
  %v1783 = vmul.f32 %v1751, %v1616
  %v1784 = vmul.f32 %v1752, %v1618
  %v1785 = vmul.f32 %v1753, %v1620
  %v1786 = vmul.f32 %v1754, %v1624
  %v1787 = vmul.f32 %v1755, %v1626
  %v1788 = vmul.f32 %v1756, %v1628
  %v1789 = vmul.f32 %v1757, %v1630
  %v1790 = vmul.f32 %v1758, %v1634
  %v1791 = vmul.f32 %v1759, %v1636
  %v1792 = vmul.f32 %v1760, %v1638
  %v1793 = vmul.f32 %v1761, %v1640
  %v1794 = vmul.f32 %v1762, %v1644
  %v1795 = vmul.f32 %v1763, %v1646
  %v1796 = vmul.f32 %v1764, %v1648
  %v1797 = vmul.f32 %v1765, %v1650
  %v1798 = vmul.f32 %v1766, %v1654
  %v1799 = vmul.f32 %v1767, %v1656
  %v1800 = vmul.f32 %v1768, %v1658
  %v1801 = vmul.f32 %v1769, %v1660
  %v1802 = vmul.f32 %v1770, %v1664
  %v1803 = vmul.f32 %v1771, %v1666
  %v1804 = vmul.f32 %v1772, %v1668
  %v1805 = vmul.f32 %v1773, %v1670
  %v1806 = vmul.f32 %v1774, %v1674
  %v1807 = vmul.f32 %v1775, %v1676
  %v1808 = vmul.f32 %v1776, %v1678
  %v1809 = vmul.f32 %v1777, %v1680
  %v1810 = vadd.f32 %v1604, %v1778
  %v1811 = vadd.f32 %v1606, %v1779
  %v1812 = vadd.f32 %v1608, %v1780
  %v1813 = vadd.f32 %v1610, %v1781
  %v1814 = vadd.f32 %v1614, %v1782
  %v1815 = vadd.f32 %v1616, %v1783
  %v1816 = vadd.f32 %v1618, %v1784
  %v1817 = vadd.f32 %v1620, %v1785
  %v1818 = vadd.f32 %v1624, %v1786
  %v1819 = vadd.f32 %v1626, %v1787
  %v1820 = vadd.f32 %v1628, %v1788
  %v1821 = vadd.f32 %v1630, %v1789
  %v1822 = vadd.f32 %v1634, %v1790
  %v1823 = vadd.f32 %v1636, %v1791
  %v1824 = vadd.f32 %v1638, %v1792
  %v1825 = vadd.f32 %v1640, %v1793
  %v1826 = vadd.f32 %v1644, %v1794
  %v1827 = vadd.f32 %v1646, %v1795
  %v1828 = vadd.f32 %v1648, %v1796
  %v1829 = vadd.f32 %v1650, %v1797
  %v1830 = vadd.f32 %v1654, %v1798
  %v1831 = vadd.f32 %v1656, %v1799
  %v1832 = vadd.f32 %v1658, %v1800
  %v1833 = vadd.f32 %v1660, %v1801
  %v1834 = vadd.f32 %v1664, %v1802
  %v1835 = vadd.f32 %v1666, %v1803
  %v1836 = vadd.f32 %v1668, %v1804
  %v1837 = vadd.f32 %v1670, %v1805
  %v1838 = vadd.f32 %v1674, %v1806
  %v1839 = vadd.f32 %v1676, %v1807
  %v1840 = vadd.f32 %v1678, %v1808
  %v1841 = vadd.f32 %v1680, %v1809
  %v1842 = vmul.f32 %v1810, 0.7978846
  %v1843 = vmul.f32 %v1811, 0.7978846
  %v1844 = vmul.f32 %v1812, 0.7978846
  %v1845 = vmul.f32 %v1813, 0.7978846
  %v1846 = vmul.f32 %v1814, 0.7978846
  %v1847 = vmul.f32 %v1815, 0.7978846
  %v1848 = vmul.f32 %v1816, 0.7978846
  %v1849 = vmul.f32 %v1817, 0.7978846
  %v1850 = vmul.f32 %v1818, 0.7978846
  %v1851 = vmul.f32 %v1819, 0.7978846
  %v1852 = vmul.f32 %v1820, 0.7978846
  %v1853 = vmul.f32 %v1821, 0.7978846
  %v1854 = vmul.f32 %v1822, 0.7978846
  %v1855 = vmul.f32 %v1823, 0.7978846
  %v1856 = vmul.f32 %v1824, 0.7978846
  %v1857 = vmul.f32 %v1825, 0.7978846
  %v1858 = vmul.f32 %v1826, 0.7978846
  %v1859 = vmul.f32 %v1827, 0.7978846
  %v1860 = vmul.f32 %v1828, 0.7978846
  %v1861 = vmul.f32 %v1829, 0.7978846
  %v1862 = vmul.f32 %v1830, 0.7978846
  %v1863 = vmul.f32 %v1831, 0.7978846
  %v1864 = vmul.f32 %v1832, 0.7978846
  %v1865 = vmul.f32 %v1833, 0.7978846
  %v1866 = vmul.f32 %v1834, 0.7978846
  %v1867 = vmul.f32 %v1835, 0.7978846
  %v1868 = vmul.f32 %v1836, 0.7978846
  %v1869 = vmul.f32 %v1837, 0.7978846
  %v1870 = vmul.f32 %v1838, 0.7978846
  %v1871 = vmul.f32 %v1839, 0.7978846
  %v1872 = vmul.f32 %v1840, 0.7978846
  %v1873 = vmul.f32 %v1841, 0.7978846
  %v1874 = vtanh.pop %v1842
  %v1875 = vtanh.pop %v1843
  %v1876 = vtanh.pop %v1844
  %v1877 = vtanh.pop %v1845
  %v1878 = vtanh.pop %v1846
  %v1879 = vtanh.pop %v1847
  %v1880 = vtanh.pop %v1848
  %v1881 = vtanh.pop %v1849
  %v1882 = vtanh.pop %v1850
  %v1883 = vtanh.pop %v1851
  %v1884 = vtanh.pop %v1852
  %v1885 = vtanh.pop %v1853
  %v1886 = vtanh.pop %v1854
  %v1887 = vtanh.pop %v1855
  %v1888 = vtanh.pop %v1856
  %v1889 = vtanh.pop %v1857
  %v1890 = vtanh.pop %v1858
  %v1891 = vtanh.pop %v1859
  %v1892 = vtanh.pop %v1860
  %v1893 = vtanh.pop %v1861
  %v1894 = vtanh.pop %v1862
  %v1895 = vtanh.pop %v1863
  %v1896 = vtanh.pop %v1864
  %v1897 = vtanh.pop %v1865
  %v1898 = vtanh.pop %v1866
  %v1899 = vtanh.pop %v1867
  %v1900 = vtanh.pop %v1868
  %v1901 = vtanh.pop %v1869
  %v1902 = vtanh.pop %v1870
  %v1903 = vtanh.pop %v1871
  %v1904 = vtanh.pop %v1872
  %v1905 = vtanh.pop %v1873
  %v1906 = vadd.f32 %v1874, 1.0
  %v1907 = vadd.f32 %v1875, 1.0
  %v1908 = vadd.f32 %v1876, 1.0
  %v1909 = vadd.f32 %v1877, 1.0
  %v1910 = vadd.f32 %v1878, 1.0
  %v1911 = vadd.f32 %v1879, 1.0
  %v1912 = vadd.f32 %v1880, 1.0
  %v1913 = vadd.f32 %v1881, 1.0
  %v1914 = vadd.f32 %v1882, 1.0
  %v1915 = vadd.f32 %v1883, 1.0
  %v1916 = vadd.f32 %v1884, 1.0
  %v1917 = vadd.f32 %v1885, 1.0
  %v1918 = vadd.f32 %v1886, 1.0
  %v1919 = vadd.f32 %v1887, 1.0
  %v1920 = vadd.f32 %v1888, 1.0
  %v1921 = vadd.f32 %v1889, 1.0
  %v1922 = vadd.f32 %v1890, 1.0
  %v1923 = vadd.f32 %v1891, 1.0
  %v1924 = vadd.f32 %v1892, 1.0
  %v1925 = vadd.f32 %v1893, 1.0
  %v1926 = vadd.f32 %v1894, 1.0
  %v1927 = vadd.f32 %v1895, 1.0
  %v1928 = vadd.f32 %v1896, 1.0
  %v1929 = vadd.f32 %v1897, 1.0
  %v1930 = vadd.f32 %v1898, 1.0
  %v1931 = vadd.f32 %v1899, 1.0
  %v1932 = vadd.f32 %v1900, 1.0
  %v1933 = vadd.f32 %v1901, 1.0
  %v1934 = vadd.f32 %v1902, 1.0
  %v1935 = vadd.f32 %v1903, 1.0
  %v1936 = vadd.f32 %v1904, 1.0
  %v1937 = vadd.f32 %v1905, 1.0
  %v1938 = vmul.f32 %v1682, %v1906
  %v1939 = vmul.f32 %v1683, %v1907
  %v1940 = vmul.f32 %v1684, %v1908
  %v1941 = vmul.f32 %v1685, %v1909
  %v1942 = vmul.f32 %v1686, %v1910
  %v1943 = vmul.f32 %v1687, %v1911
  %v1944 = vmul.f32 %v1688, %v1912
  %v1945 = vmul.f32 %v1689, %v1913
  %v1946 = vmul.f32 %v1690, %v1914
  %v1947 = vmul.f32 %v1691, %v1915
  %v1948 = vmul.f32 %v1692, %v1916
  %v1949 = vmul.f32 %v1693, %v1917
  %v1950 = vmul.f32 %v1694, %v1918
  %v1951 = vmul.f32 %v1695, %v1919
  %v1952 = vmul.f32 %v1696, %v1920
  %v1953 = vmul.f32 %v1697, %v1921
  %v1954 = vmul.f32 %v1698, %v1922
  %v1955 = vmul.f32 %v1699, %v1923
  %v1956 = vmul.f32 %v1700, %v1924
  %v1957 = vmul.f32 %v1701, %v1925
  %v1958 = vmul.f32 %v1702, %v1926
  %v1959 = vmul.f32 %v1703, %v1927
  %v1960 = vmul.f32 %v1704, %v1928
  %v1961 = vmul.f32 %v1705, %v1929
  %v1962 = vmul.f32 %v1706, %v1930
  %v1963 = vmul.f32 %v1707, %v1931
  %v1964 = vmul.f32 %v1708, %v1932
  %v1965 = vmul.f32 %v1709, %v1933
  %v1966 = vmul.f32 %v1710, %v1934
  %v1967 = vmul.f32 %v1711, %v1935
  %v1968 = vmul.f32 %v1712, %v1936
  %v1969 = vmul.f32 %v1713, %v1937
  %v1970 = vpack.c.bf16 %v1940, %v1938
  %v1971 = vpack.c.bf16 %v1941, %v1939
  %v1972 = vpack.c.bf16 %v1944, %v1942
  %v1973 = vpack.c.bf16 %v1945, %v1943
  %v1974 = vpack.c.bf16 %v1948, %v1946
  %v1975 = vpack.c.bf16 %v1949, %v1947
  %v1976 = vpack.c.bf16 %v1952, %v1950
  %v1977 = vpack.c.bf16 %v1953, %v1951
  %v1978 = vpack.c.bf16 %v1956, %v1954
  %v1979 = vpack.c.bf16 %v1957, %v1955
  %v1980 = vpack.c.bf16 %v1960, %v1958
  %v1981 = vpack.c.bf16 %v1961, %v1959
  %v1982 = vpack.c.bf16 %v1964, %v1962
  %v1983 = vpack.c.bf16 %v1965, %v1963
  %v1984 = vpack.c.bf16 %v1968, %v1966
  %v1985 = vpack.c.bf16 %v1969, %v1967
  %v1986 = vld [vmem:[%s11] sm:$0xff]
  %v1987 = vld [vmem:[%s11 + $0x8] sm:$0xf]
  %v1988 = vld [vmem:[%s11 + $0xc] sm:$0xff]
  %v1989 = vld [vmem:[%s11 + $0x14] sm:$0xf]
  %v1990 = vld [vmem:[%s11 + $0x18] sm:$0xff]
  %v1991 = vld [vmem:[%s11 + $0x20] sm:$0xf]
  %v1992 = vld [vmem:[%s11 + $0x24] sm:$0xff]
  %v1993 = vld [vmem:[%s11 + $0x2c] sm:$0xf]
  %v1994 = vld [vmem:[%s11 + $0x30] sm:$0xff]
  %v1995 = vld [vmem:[%s11 + $0x38] sm:$0xf]
  %v1996 = vld [vmem:[%s11 + $0x3c] sm:$0xff]
  %v1997 = vld [vmem:[%s11 + $0x44] sm:$0xf]
  %v1998 = vld [vmem:[%s11 + $0x48] sm:$0xff]
  %v1999 = vld [vmem:[%s11 + $0x50] sm:$0xf]
  %v2000 = vld [vmem:[%s11 + $0x54] sm:$0xff]
  %v2001 = vld [vmem:[%s11 + $0x5c] sm:$0xf]
  %v2002 = vld [vmem:[%s11 + $0x60] sm:$0xff]
  %v2003 = vld [vmem:[%s11 + $0x68] sm:$0xf]
  %v2004 = vld [vmem:[%s11 + $0x6c] sm:$0xff]
  %v2005 = vld [vmem:[%s11 + $0x74] sm:$0xf]
  %v2006 = vld [vmem:[%s11 + $0x78] sm:$0xff]
  %v2007 = vld [vmem:[%s11 + $0x80] sm:$0xf]
  %v2008 = vld [vmem:[%s11 + $0x84] sm:$0xff]
  %v2009 = vld [vmem:[%s11 + $0x8c] sm:$0xf]
  %v2010 = vld [vmem:[%s11 + $0x90] sm:$0xff]
  %v2011 = vld [vmem:[%s11 + $0x98] sm:$0xf]
  %v2012 = vld [vmem:[%s11 + $0x9c] sm:$0xff]
  %v2013 = vld [vmem:[%s11 + $0xa4] sm:$0xf]
  %v2014 = vld [vmem:[%s11 + $0xa8] sm:$0xff]
  %v2015 = vld [vmem:[%s11 + $0xb0] sm:$0xf]
  %v2016 = vld [vmem:[%s11 + $0xb4] sm:$0xff]
  %v2017 = vld [vmem:[%s11 + $0xbc] sm:$0xf]
  %v2018 = vld [vmem:[%s11 + $0xc0] sm:$0xff]
  %v2019 = vld [vmem:[%s11 + $0xc8] sm:$0xf]
  %v2020 = vld [vmem:[%s11 + $0xcc] sm:$0xff]
  %v2021 = vld [vmem:[%s11 + $0xd4] sm:$0xf]
  %v2022 = vld [vmem:[%s11 + $0xd8] sm:$0xff]
  %v2023 = vld [vmem:[%s11 + $0xe0] sm:$0xf]
  %v2024 = vld [vmem:[%s11 + $0xe4] sm:$0xff]
  %v2025 = vld [vmem:[%s11 + $0xec] sm:$0xf]
  %v2026 = vld [vmem:[%s11 + $0xf0] sm:$0xff]
  %v2027 = vld [vmem:[%s11 + $0xf8] sm:$0xf]
  %v2028 = vld [vmem:[%s11 + $0xfc] sm:$0xff]
  %v2029 = vld [vmem:[%s11 + $0x104] sm:$0xf]
  %v2030 = vld [vmem:[%s11 + $0x108] sm:$0xff]
  %v2031 = vld [vmem:[%s11 + $0x110] sm:$0xf]
  %v2032 = vld [vmem:[%s11 + $0x114] sm:$0xff]
  %v2033 = vld [vmem:[%s11 + $0x11c] sm:$0xf]
  %v2034 = vld [vmem:[%s11 + $0x120] sm:$0xff]
  %v2035 = vld [vmem:[%s11 + $0x128] sm:$0xf]
  %v2036 = vld [vmem:[%s11 + $0x12c] sm:$0xff]
  %v2037 = vld [vmem:[%s11 + $0x134] sm:$0xf]
  %v2038 = vld [vmem:[%s11 + $0x138] sm:$0xff]
  %v2039 = vld [vmem:[%s11 + $0x140] sm:$0xf]
  %v2040 = vld [vmem:[%s11 + $0x144] sm:$0xff]
  %v2041 = vld [vmem:[%s11 + $0x14c] sm:$0xf]
  %v2042 = vld [vmem:[%s11 + $0x150] sm:$0xff]
  %v2043 = vld [vmem:[%s11 + $0x158] sm:$0xf]
  %v2044 = vld [vmem:[%s11 + $0x15c] sm:$0xff]
  %v2045 = vld [vmem:[%s11 + $0x164] sm:$0xf]
  %v2046 = vld [vmem:[%s11 + $0x168] sm:$0xff]
  %v2047 = vld [vmem:[%s11 + $0x170] sm:$0xf]
  %v2048 = vld [vmem:[%s11 + $0x174] sm:$0xff]
  %v2049 = vld [vmem:[%s11 + $0x17c] sm:$0xf]
  %v2050 = vld [vmem:[%s12] sm:$0x7]
  %v2052 = vlaneseq
  %v2053 = vshrl.u32 %v2052, 7
  %v2054 = vsub.s32 0, %v2053
  %v2055 = vrot.slane %v2050, %v2054
  %v2056 = vlaneseq
  %v2057 = vshrl.u32 %v2056, 7
  %v2058 = vsub.s32 1, %v2057
  %v2059 = vrot.slane %v2050, %v2058
  %v2060 = vlaneseq
  %v2061 = vshrl.u32 %v2060, 7
  %v2062 = vsub.s32 2, %v2061
  %v2063 = vrot.slane %v2050, %v2062
  %v2131 = vunpack.c.l.b16 %v1986
  %v2132 = vunpack.c.h.b16 %v1986
  %v2133 = vunpack.c.l.b16 %v1987
  %v2134 = vunpack.c.l.b16 %v1988
  %v2135 = vunpack.c.h.b16 %v1988
  %v2136 = vunpack.c.l.b16 %v1989
  %v2137 = vunpack.c.l.b16 %v1990
  %v2138 = vunpack.c.h.b16 %v1990
  %v2139 = vunpack.c.l.b16 %v1991
  %v2140 = vunpack.c.l.b16 %v1992
  %v2141 = vunpack.c.h.b16 %v1992
  %v2142 = vunpack.c.l.b16 %v1993
  %v2143 = vunpack.c.l.b16 %v1994
  %v2144 = vunpack.c.h.b16 %v1994
  %v2145 = vunpack.c.l.b16 %v1995
  %v2146 = vunpack.c.l.b16 %v1996
  %v2147 = vunpack.c.h.b16 %v1996
  %v2148 = vunpack.c.l.b16 %v1997
  %v2149 = vunpack.c.l.b16 %v1998
  %v2150 = vunpack.c.h.b16 %v1998
  %v2151 = vunpack.c.l.b16 %v1999
  %v2152 = vunpack.c.l.b16 %v2000
  %v2153 = vunpack.c.h.b16 %v2000
  %v2154 = vunpack.c.l.b16 %v2001
  %v2155 = vunpack.c.l.b16 %v2002
  %v2156 = vunpack.c.h.b16 %v2002
  %v2157 = vunpack.c.l.b16 %v2003
  %v2158 = vunpack.c.l.b16 %v2004
  %v2159 = vunpack.c.h.b16 %v2004
  %v2160 = vunpack.c.l.b16 %v2005
  %v2161 = vunpack.c.l.b16 %v2006
  %v2162 = vunpack.c.h.b16 %v2006
  %v2163 = vunpack.c.l.b16 %v2007
  %v2164 = vunpack.c.l.b16 %v2008
  %v2165 = vunpack.c.h.b16 %v2008
  %v2166 = vunpack.c.l.b16 %v2009
  %v2167 = vunpack.c.l.b16 %v2010
  %v2168 = vunpack.c.h.b16 %v2010
  %v2169 = vunpack.c.l.b16 %v2011
  %v2170 = vunpack.c.l.b16 %v2012
  %v2171 = vunpack.c.h.b16 %v2012
  %v2172 = vunpack.c.l.b16 %v2013
  %v2173 = vunpack.c.l.b16 %v2014
  %v2174 = vunpack.c.h.b16 %v2014
  %v2175 = vunpack.c.l.b16 %v2015
  %v2176 = vunpack.c.l.b16 %v2016
  %v2177 = vunpack.c.h.b16 %v2016
  %v2178 = vunpack.c.l.b16 %v2017
  %v2179 = vunpack.c.l.b16 %v2018
  %v2180 = vunpack.c.h.b16 %v2018
  %v2181 = vunpack.c.l.b16 %v2019
  %v2182 = vunpack.c.l.b16 %v2020
  %v2183 = vunpack.c.h.b16 %v2020
  %v2184 = vunpack.c.l.b16 %v2021
  %v2185 = vunpack.c.l.b16 %v2022
  %v2186 = vunpack.c.h.b16 %v2022
  %v2187 = vunpack.c.l.b16 %v2023
  %v2188 = vunpack.c.l.b16 %v2024
  %v2189 = vunpack.c.h.b16 %v2024
  %v2190 = vunpack.c.l.b16 %v2025
  %v2191 = vunpack.c.l.b16 %v2026
  %v2192 = vunpack.c.h.b16 %v2026
  %v2193 = vunpack.c.l.b16 %v2027
  %v2194 = vunpack.c.l.b16 %v2028
  %v2195 = vunpack.c.h.b16 %v2028
  %v2196 = vunpack.c.l.b16 %v2029
  %v2197 = vunpack.c.l.b16 %v2030
  %v2198 = vunpack.c.h.b16 %v2030
  %v2199 = vunpack.c.l.b16 %v2031
  %v2200 = vunpack.c.l.b16 %v2032
  %v2201 = vunpack.c.h.b16 %v2032
  %v2202 = vunpack.c.l.b16 %v2033
  %v2203 = vunpack.c.l.b16 %v2034
  %v2204 = vunpack.c.h.b16 %v2034
  %v2205 = vunpack.c.l.b16 %v2035
  %v2206 = vunpack.c.l.b16 %v2036
  %v2207 = vunpack.c.h.b16 %v2036
  %v2208 = vunpack.c.l.b16 %v2037
  %v2209 = vunpack.c.l.b16 %v2038
  %v2210 = vunpack.c.h.b16 %v2038
  %v2211 = vunpack.c.l.b16 %v2039
  %v2212 = vunpack.c.l.b16 %v2040
  %v2213 = vunpack.c.h.b16 %v2040
  %v2214 = vunpack.c.l.b16 %v2041
  %v2215 = vunpack.c.l.b16 %v2042
  %v2216 = vunpack.c.h.b16 %v2042
  %v2217 = vunpack.c.l.b16 %v2043
  %v2218 = vunpack.c.l.b16 %v2044
  %v2219 = vunpack.c.h.b16 %v2044
  %v2220 = vunpack.c.l.b16 %v2045
  %v2221 = vunpack.c.l.b16 %v2046
  %v2222 = vunpack.c.h.b16 %v2046
  %v2223 = vunpack.c.l.b16 %v2047
  %v2224 = vunpack.c.l.b16 %v2048
  %v2225 = vunpack.c.h.b16 %v2048
  %v2226 = vunpack.c.l.b16 %v2049
  %v2227 = vpack.c.b16 %v2134, %v2131
  %v2228 = vpack.c.b16 %v2135, %v2132
  %v2229 = vpack.c.b16 %v2136, %v2133
  %v2230 = vpack.c.b16 %v2140, %v2137
  %v2231 = vpack.c.b16 %v2141, %v2138
  %v2232 = vpack.c.b16 %v2142, %v2139
  %v2233 = vpack.c.b16 %v2146, %v2143
  %v2234 = vpack.c.b16 %v2147, %v2144
  %v2235 = vpack.c.b16 %v2148, %v2145
  %v2236 = vpack.c.b16 %v2152, %v2149
  %v2237 = vpack.c.b16 %v2153, %v2150
  %v2238 = vpack.c.b16 %v2154, %v2151
  %v2239 = vpack.c.b16 %v2158, %v2155
  %v2240 = vpack.c.b16 %v2159, %v2156
  %v2241 = vpack.c.b16 %v2160, %v2157
  %v2242 = vpack.c.b16 %v2164, %v2161
  %v2243 = vpack.c.b16 %v2165, %v2162
  %v2244 = vpack.c.b16 %v2166, %v2163
  %v2245 = vpack.c.b16 %v2170, %v2167
  %v2246 = vpack.c.b16 %v2171, %v2168
  %v2247 = vpack.c.b16 %v2172, %v2169
  %v2248 = vpack.c.b16 %v2176, %v2173
  %v2249 = vpack.c.b16 %v2177, %v2174
  %v2250 = vpack.c.b16 %v2178, %v2175
  %v2251 = vpack.c.b16 %v2182, %v2179
  %v2252 = vpack.c.b16 %v2183, %v2180
  %v2253 = vpack.c.b16 %v2184, %v2181
  %v2254 = vpack.c.b16 %v2188, %v2185
  %v2255 = vpack.c.b16 %v2189, %v2186
  %v2256 = vpack.c.b16 %v2190, %v2187
  %v2257 = vpack.c.b16 %v2194, %v2191
  %v2258 = vpack.c.b16 %v2195, %v2192
  %v2259 = vpack.c.b16 %v2196, %v2193
  %v2260 = vpack.c.b16 %v2200, %v2197
  %v2261 = vpack.c.b16 %v2201, %v2198
  %v2262 = vpack.c.b16 %v2202, %v2199
  %v2263 = vpack.c.b16 %v2206, %v2203
  %v2264 = vpack.c.b16 %v2207, %v2204
  %v2265 = vpack.c.b16 %v2208, %v2205
  %v2266 = vpack.c.b16 %v2212, %v2209
  %v2267 = vpack.c.b16 %v2213, %v2210
  %v2268 = vpack.c.b16 %v2214, %v2211
  %v2269 = vpack.c.b16 %v2218, %v2215
  %v2270 = vpack.c.b16 %v2219, %v2216
  %v2271 = vpack.c.b16 %v2220, %v2217
  %v2272 = vpack.c.b16 %v2224, %v2221
  %v2273 = vpack.c.b16 %v2225, %v2222
  %v2274 = vpack.c.b16 %v2226, %v2223
  %2323 = vmatprep.subr.bf16.mxu0 %v2228
  %2324 = vmatpush1.bf16.msra.mxu0 %v2227
  %2325 = vmatprep.subr.bf16.mxu0 %v2231
  %2326 = vmatpush1.bf16.msra.mxu0 %v2230
  %2327 = vmatprep.subr.bf16.mxu0 %v2234
  %2328 = vmatpush1.bf16.msra.mxu0 %v2233
  %2329 = vmatprep.subr.bf16.mxu0 %v2237
  %2330 = vmatpush1.bf16.msra.mxu0 %v2236
  %2331 = vmatprep.subr.bf16.mxu0 %v2240
  %2332 = vmatpush1.bf16.msra.mxu0 %v2239
  %2333 = vmatprep.subr.bf16.mxu0 %v2243
  %2334 = vmatpush1.bf16.msra.mxu0 %v2242
  %2335 = vmatprep.subr.bf16.mxu0 %v2246
  %2336 = vmatpush1.bf16.msra.mxu0 %v2245
  %2337 = vmatprep.subr.bf16.mxu0 %v2249
  %2338 = vmatpush1.bf16.msra.mxu0 %v2248
  %2339 = vmatprep.subr.bf16.mxu0 %v2252
  %2340 = vmatpush1.bf16.msra.mxu0 %v2251
  %2341 = vmatprep.subr.bf16.mxu0 %v2255
  %2342 = vmatpush1.bf16.msra.mxu0 %v2254
  %2343 = vmatprep.subr.bf16.mxu0 %v2258
  %2344 = vmatpush1.bf16.msra.mxu0 %v2257
  %2345 = vmatprep.subr.bf16.mxu0 %v2261
  %2346 = vmatpush1.bf16.msra.mxu0 %v2260
  %2347 = vmatprep.subr.bf16.mxu0 %v2264
  %2348 = vmatpush1.bf16.msra.mxu0 %v2263
  %2349 = vmatprep.subr.bf16.mxu0 %v2267
  %2350 = vmatpush1.bf16.msra.mxu0 %v2266
  %2351 = vmatprep.subr.bf16.mxu0 %v2270
  %2352 = vmatpush1.bf16.msra.mxu0 %v2269
  %2353 = vmatprep.subr.bf16.mxu0 %v2273
  %2354 = vmatpush1.bf16.msra.mxu0 %v2272
  %2355 = vmatprep.mubr.bf16.mxu0 %v1971
  %2356 = vmatmul.mubr.bf16.gmra.mrb[0].mxu0 %v1970
  %v2357 = vpop.f32.mrb[0].mxu0
  %v2358 = vadd.f32 %v2055, %v2357
  %v2359 = vpop.f32.mrb[0].mxu0
  %v2360 = vadd.f32 %v2059, %v2359
  %v2361 = vpop.f32.mrb[0].mxu0
  %v2362 = vadd.f32 %v2055, %v2361
  %v2363 = vpop.f32.mrb[0].mxu0
  %v2364 = vadd.f32 %v2059, %v2363
  %2365 = vmatprep.mubr.bf16.mxu0 %v1973
  %2366 = vmatmul.mubr.bf16.gmra.mrb[0].mxu0 %v1972
  %v2367 = vpop.f32.mrb[0].mxu0
  %v2368 = vadd.f32 %v2055, %v2367
  %v2369 = vpop.f32.mrb[0].mxu0
  %v2370 = vadd.f32 %v2059, %v2369
  %v2371 = vpop.f32.mrb[0].mxu0
  %v2372 = vadd.f32 %v2055, %v2371
  %v2373 = vpop.f32.mrb[0].mxu0
  %v2374 = vadd.f32 %v2059, %v2373
  %2375 = vmatprep.mubr.bf16.mxu0 %v1975
  %2376 = vmatmul.mubr.bf16.gmra.mrb[0].mxu0 %v1974
  %v2377 = vpop.f32.mrb[0].mxu0
  %v2378 = vadd.f32 %v2055, %v2377
  %v2379 = vpop.f32.mrb[0].mxu0
  %v2380 = vadd.f32 %v2059, %v2379
  %v2381 = vpop.f32.mrb[0].mxu0
  %v2382 = vadd.f32 %v2055, %v2381
  %v2383 = vpop.f32.mrb[0].mxu0
  %v2384 = vadd.f32 %v2059, %v2383
  %2385 = vmatprep.mubr.bf16.mxu0 %v1977
  %2386 = vmatmul.mubr.bf16.gmra.mrb[0].mxu0 %v1976
  %v2387 = vpop.f32.mrb[0].mxu0
  %v2388 = vadd.f32 %v2055, %v2387
  %v2389 = vpop.f32.mrb[0].mxu0
  %v2390 = vadd.f32 %v2059, %v2389
  %v2391 = vpop.f32.mrb[0].mxu0
  %v2392 = vadd.f32 %v2055, %v2391
  %v2393 = vpop.f32.mrb[0].mxu0
  %v2394 = vadd.f32 %v2059, %v2393
  %2395 = vmatprep.mubr.bf16.mxu0 %v1979
  %2396 = vmatmul.mubr.bf16.gmra.mrb[0].mxu0 %v1978
  %v2397 = vpop.f32.mrb[0].mxu0
  %v2398 = vadd.f32 %v2055, %v2397
  %v2399 = vpop.f32.mrb[0].mxu0
  %v2400 = vadd.f32 %v2059, %v2399
  %v2401 = vpop.f32.mrb[0].mxu0
  %v2402 = vadd.f32 %v2055, %v2401
  %v2403 = vpop.f32.mrb[0].mxu0
  %v2404 = vadd.f32 %v2059, %v2403
  %2405 = vmatprep.mubr.bf16.mxu0 %v1981
  %2406 = vmatmul.mubr.bf16.gmra.mrb[0].mxu0 %v1980
  %v2407 = vpop.f32.mrb[0].mxu0
  %v2408 = vadd.f32 %v2055, %v2407
  %v2409 = vpop.f32.mrb[0].mxu0
  %v2410 = vadd.f32 %v2059, %v2409
  %v2411 = vpop.f32.mrb[0].mxu0
  %v2412 = vadd.f32 %v2055, %v2411
  %v2413 = vpop.f32.mrb[0].mxu0
  %v2414 = vadd.f32 %v2059, %v2413
  %2415 = vmatprep.mubr.bf16.mxu0 %v1983
  %2416 = vmatmul.mubr.bf16.gmra.mrb[0].mxu0 %v1982
  %v2417 = vpop.f32.mrb[0].mxu0
  %v2418 = vadd.f32 %v2055, %v2417
  %v2419 = vpop.f32.mrb[0].mxu0
  %v2420 = vadd.f32 %v2059, %v2419
  %v2421 = vpop.f32.mrb[0].mxu0
  %v2422 = vadd.f32 %v2055, %v2421
  %v2423 = vpop.f32.mrb[0].mxu0
  %v2424 = vadd.f32 %v2059, %v2423
  %2425 = vmatprep.mubr.bf16.mxu0 %v1985
  %2426 = vmatmul.mubr.bf16.gmra.mrb[0].mxu0 %v1984
  %v2427 = vpop.f32.mrb[0].mxu0
  %v2428 = vadd.f32 %v2055, %v2427
  %v2429 = vpop.f32.mrb[0].mxu0
  %v2430 = vadd.f32 %v2059, %v2429
  %v2431 = vpop.f32.mrb[0].mxu0
  %v2432 = vadd.f32 %v2055, %v2431
  %v2433 = vpop.f32.mrb[0].mxu0
  %v2434 = vadd.f32 %v2059, %v2433
  %2435 = vdwg.mxu0
  %2436 = vmatprep.subr.bf16.mxu0 0
  %2437 = vmatpush1.bf16.msra.mxu0 %v2229
  %2438 = vmatprep.subr.bf16.mxu0 0
  %2439 = vmatpush1.bf16.msra.mxu0 %v2232
  %2440 = vmatprep.subr.bf16.mxu0 0
  %2441 = vmatpush1.bf16.msra.mxu0 %v2235
  %2442 = vmatprep.subr.bf16.mxu0 0
  %2443 = vmatpush1.bf16.msra.mxu0 %v2238
  %2444 = vmatprep.subr.bf16.mxu0 0
  %2445 = vmatpush1.bf16.msra.mxu0 %v2241
  %2446 = vmatprep.subr.bf16.mxu0 0
  %2447 = vmatpush1.bf16.msra.mxu0 %v2244
  %2448 = vmatprep.subr.bf16.mxu0 0
  %2449 = vmatpush1.bf16.msra.mxu0 %v2247
  %2450 = vmatprep.subr.bf16.mxu0 0
  %2451 = vmatpush1.bf16.msra.mxu0 %v2250
  %2452 = vmatprep.subr.bf16.mxu0 0
  %2453 = vmatpush1.bf16.msra.mxu0 %v2253
  %2454 = vmatprep.subr.bf16.mxu0 0
  %2455 = vmatpush1.bf16.msra.mxu0 %v2256
  %2456 = vmatprep.subr.bf16.mxu0 0
  %2457 = vmatpush1.bf16.msra.mxu0 %v2259
  %2458 = vmatprep.subr.bf16.mxu0 0
  %2459 = vmatpush1.bf16.msra.mxu0 %v2262
  %2460 = vmatprep.subr.bf16.mxu0 0
  %2461 = vmatpush1.bf16.msra.mxu0 %v2265
  %2462 = vmatprep.subr.bf16.mxu0 0
  %2463 = vmatpush1.bf16.msra.mxu0 %v2268
  %2464 = vmatprep.subr.bf16.mxu0 0
  %2465 = vmatpush1.bf16.msra.mxu0 %v2271
  %2466 = vmatprep.subr.bf16.mxu0 0
  %2467 = vmatpush1.bf16.msra.mxu0 %v2274
  %2468 = vmatprep.mubr.bf16.mxu0 %v1971
  %2469 = vmatmul.mubr.bf16.gmra.mrb[0].mxu0 %v1970
  %v2470 = vpop.f32.mrb[0].mxu0
  %v2471 = vadd.f32 %v2063, %v2470
  %v2472 = vpop.f32.mrb[0].mxu0
  %v2473 = vpop.f32.mrb[0].mxu0
  %v2474 = vadd.f32 %v2063, %v2473
  %v2475 = vpop.f32.mrb[0].mxu0
  %2476 = vmatprep.mubr.bf16.mxu0 %v1973
  %2477 = vmatmul.mubr.bf16.gmra.mrb[0].mxu0 %v1972
  %v2478 = vpop.f32.mrb[0].mxu0
  %v2479 = vadd.f32 %v2063, %v2478
  %v2480 = vpop.f32.mrb[0].mxu0
  %v2481 = vpop.f32.mrb[0].mxu0
  %v2482 = vadd.f32 %v2063, %v2481
  %v2483 = vpop.f32.mrb[0].mxu0
  %2484 = vmatprep.mubr.bf16.mxu0 %v1975
  %2485 = vmatmul.mubr.bf16.gmra.mrb[0].mxu0 %v1974
  %v2486 = vpop.f32.mrb[0].mxu0
  %v2487 = vadd.f32 %v2063, %v2486
  %v2488 = vpop.f32.mrb[0].mxu0
  %v2489 = vpop.f32.mrb[0].mxu0
  %v2490 = vadd.f32 %v2063, %v2489
  %v2491 = vpop.f32.mrb[0].mxu0
  %2492 = vmatprep.mubr.bf16.mxu0 %v1977
  %2493 = vmatmul.mubr.bf16.gmra.mrb[0].mxu0 %v1976
  %v2494 = vpop.f32.mrb[0].mxu0
  %v2495 = vadd.f32 %v2063, %v2494
  %v2496 = vpop.f32.mrb[0].mxu0
  %v2497 = vpop.f32.mrb[0].mxu0
  %v2498 = vadd.f32 %v2063, %v2497
  %v2499 = vpop.f32.mrb[0].mxu0
  %2500 = vmatprep.mubr.bf16.mxu0 %v1979
  %2501 = vmatmul.mubr.bf16.gmra.mrb[0].mxu0 %v1978
  %v2502 = vpop.f32.mrb[0].mxu0
  %v2503 = vadd.f32 %v2063, %v2502
  %v2504 = vpop.f32.mrb[0].mxu0
  %v2505 = vpop.f32.mrb[0].mxu0
  %v2506 = vadd.f32 %v2063, %v2505
  %v2507 = vpop.f32.mrb[0].mxu0
  %2508 = vmatprep.mubr.bf16.mxu0 %v1981
  %2509 = vmatmul.mubr.bf16.gmra.mrb[0].mxu0 %v1980
  %v2510 = vpop.f32.mrb[0].mxu0
  %v2511 = vadd.f32 %v2063, %v2510
  %v2512 = vpop.f32.mrb[0].mxu0
  %v2513 = vpop.f32.mrb[0].mxu0
  %v2514 = vadd.f32 %v2063, %v2513
  %v2515 = vpop.f32.mrb[0].mxu0
  %2516 = vmatprep.mubr.bf16.mxu0 %v1983
  %2517 = vmatmul.mubr.bf16.gmra.mrb[0].mxu0 %v1982
  %v2518 = vpop.f32.mrb[0].mxu0
  %v2519 = vadd.f32 %v2063, %v2518
  %v2520 = vpop.f32.mrb[0].mxu0
  %v2521 = vpop.f32.mrb[0].mxu0
  %v2522 = vadd.f32 %v2063, %v2521
  %v2523 = vpop.f32.mrb[0].mxu0
  %2524 = vmatprep.mubr.bf16.mxu0 %v1985
  %2525 = vmatmul.mubr.bf16.gmra.mrb[0].mxu0 %v1984
  %v2526 = vpop.f32.mrb[0].mxu0
  %v2527 = vadd.f32 %v2063, %v2526
  %v2528 = vpop.f32.mrb[0].mxu0
  %v2529 = vpop.f32.mrb[0].mxu0
  %v2530 = vadd.f32 %v2063, %v2529
  %v2531 = vpop.f32.mrb[0].mxu0
  %2532 = vdwg.mxu0
  %2533 = vst [vmem:[%s13] sm:$0xff] %v2358
  %2534 = vst [vmem:[%s13 + $0x8] sm:$0xff] %v2360
  %2535 = vst [vmem:[%s13 + $0x10] sm:$0xff] %v2471
  %2536 = vst [vmem:[%s13 + $0x18] sm:$0xff] %v2362
  %2537 = vst [vmem:[%s13 + $0x20] sm:$0xff] %v2364
  %2538 = vst [vmem:[%s13 + $0x28] sm:$0xff] %v2474
  %2539 = vst [vmem:[%s13 + $0x30] sm:$0xff] %v2368
  %2540 = vst [vmem:[%s13 + $0x38] sm:$0xff] %v2370
  %2541 = vst [vmem:[%s13 + $0x40] sm:$0xff] %v2479
  %2542 = vst [vmem:[%s13 + $0x48] sm:$0xff] %v2372
  %2543 = vst [vmem:[%s13 + $0x50] sm:$0xff] %v2374
  %2544 = vst [vmem:[%s13 + $0x58] sm:$0xff] %v2482
  %2545 = vst [vmem:[%s13 + $0x60] sm:$0xff] %v2378
  %2546 = vst [vmem:[%s13 + $0x68] sm:$0xff] %v2380
  %2547 = vst [vmem:[%s13 + $0x70] sm:$0xff] %v2487
  %2548 = vst [vmem:[%s13 + $0x78] sm:$0xff] %v2382
  %2549 = vst [vmem:[%s13 + $0x80] sm:$0xff] %v2384
  %2550 = vst [vmem:[%s13 + $0x88] sm:$0xff] %v2490
  %2551 = vst [vmem:[%s13 + $0x90] sm:$0xff] %v2388
  %2552 = vst [vmem:[%s13 + $0x98] sm:$0xff] %v2390
  %2553 = vst [vmem:[%s13 + $0xa0] sm:$0xff] %v2495
  %2554 = vst [vmem:[%s13 + $0xa8] sm:$0xff] %v2392
  %2555 = vst [vmem:[%s13 + $0xb0] sm:$0xff] %v2394
  %2556 = vst [vmem:[%s13 + $0xb8] sm:$0xff] %v2498
  %2557 = vst [vmem:[%s13 + $0xc0] sm:$0xff] %v2398
  %2558 = vst [vmem:[%s13 + $0xc8] sm:$0xff] %v2400
  %2559 = vst [vmem:[%s13 + $0xd0] sm:$0xff] %v2503
  %2560 = vst [vmem:[%s13 + $0xd8] sm:$0xff] %v2402
  %2561 = vst [vmem:[%s13 + $0xe0] sm:$0xff] %v2404
  %2562 = vst [vmem:[%s13 + $0xe8] sm:$0xff] %v2506
  %2563 = vst [vmem:[%s13 + $0xf0] sm:$0xff] %v2408
  %2564 = vst [vmem:[%s13 + $0xf8] sm:$0xff] %v2410
  %2565 = vst [vmem:[%s13 + $0x100] sm:$0xff] %v2511
  %2566 = vst [vmem:[%s13 + $0x108] sm:$0xff] %v2412
  %2567 = vst [vmem:[%s13 + $0x110] sm:$0xff] %v2414
  %2568 = vst [vmem:[%s13 + $0x118] sm:$0xff] %v2514
  %2569 = vst [vmem:[%s13 + $0x120] sm:$0xff] %v2418
  %2570 = vst [vmem:[%s13 + $0x128] sm:$0xff] %v2420
  %2571 = vst [vmem:[%s13 + $0x130] sm:$0xff] %v2519
  %2572 = vst [vmem:[%s13 + $0x138] sm:$0xff] %v2422
  %2573 = vst [vmem:[%s13 + $0x140] sm:$0xff] %v2424
  %2574 = vst [vmem:[%s13 + $0x148] sm:$0xff] %v2522
  %2575 = vst [vmem:[%s13 + $0x150] sm:$0xff] %v2428
  %2576 = vst [vmem:[%s13 + $0x158] sm:$0xff] %v2430
  %2577 = vst [vmem:[%s13 + $0x160] sm:$0xff] %v2527
  %2578 = vst [vmem:[%s13 + $0x168] sm:$0xff] %v2432
  %2579 = vst [vmem:[%s13 + $0x170] sm:$0xff] %v2434
  %2580 = vst [vmem:[%s13 + $0x178] sm:$0xff] %v2530
  // Predicated region
  $region54: #{sentence_autoencoder_forward.1} parent=0 // pred_check
    _
  $region55: #{sentence_autoencoder_forward.1} parent=0 // pred_check_branch
    %2582 = sbr.rel (0) target = $region57
  $region56: #{sentence_autoencoder_forward.1} parent=0 // pred_region
    _
  $region57: #{sentence_autoencoder_forward.1} parent=0 // pred_fallthru
    _
  // Predicated region
  $region58: #{sentence_autoencoder_forward.1} parent=0 // pred_check
    _
  $region59: #{sentence_autoencoder_forward.1} parent=0 // pred_check_branch
    %2584 = sbr.rel (0) target = $region61
  $region60: #{sentence_autoencoder_forward.1} parent=0 // pred_region
    _
  $region61: #{sentence_autoencoder_forward.1} parent=0 // pred_fallthru
    _
  // Predicated region
  $region62: #{sentence_autoencoder_forward.1} parent=0 // pred_check
    _
  $region63: #{sentence_autoencoder_forward.1} parent=0 // pred_check_branch
    %2586 = sbr.rel (0) target = $region65
  $region64: #{sentence_autoencoder_forward.1} parent=0 // pred_region
    _
  $region65: #{sentence_autoencoder_forward.1} parent=0 // pred_fallthru
    _
  // Predicated region
  $region66: #{sentence_autoencoder_forward.1} parent=0 // pred_check
    _
  $region67: #{sentence_autoencoder_forward.1} parent=0 // pred_check_branch
    %2588 = sbr.rel (0) target = $region69
  $region68: #{sentence_autoencoder_forward.1} parent=0 // pred_region
    _
  $region69: #{sentence_autoencoder_forward.1} parent=0 // pred_fallthru
    _

</llo_original>
